<compile_context>
chip_gen: v7x
topology: tpu7x:2x2x1
jax: 0.10.0
libtpu: 0.0.40
codegen_flags: <defaults>
</compile_context>

<pallas_src>
import math
from functools import partial

import jax
import jax.numpy as jnp
from jax.experimental import pallas as pl
from jax.experimental.pallas import tpu as pltpu

# ----------------- configuration mirroring DecoderKIDProMP.__init__ -----------------
LATENT_DIM = 3
TIME_DIM = 1                      # EndEffectorPose.get_time_dimension()
HIDDEN = [32, 32]                 # hidden_neurons
DOF = 7                           # degrees_of_freedom

# Franka Panda joint limits (min_joints / max_joints args)
MIN_JOINTS = [-2.8973, -1.7628, -2.8973, -3.0718, -2.8973, -0.0175, -2.8973]
MAX_JOINTS = [ 2.8973,  1.7628,  2.8973, -0.0698,  2.8973,  3.7525,  2.8973]

# Franka Panda DH parameters, Craig (modified DH) convention. Last row = flange.
DH_PARAMS_CRAIG = [
    dict(a=0.0,     d=0.333, alpha=0.0,           theta=0.0),
    dict(a=0.0,     d=0.0,   alpha=-math.pi / 2,  theta=0.0),
    dict(a=0.0,     d=0.316, alpha=math.pi / 2,   theta=0.0),
    dict(a=0.0825,  d=0.0,   alpha=math.pi / 2,   theta=0.0),
    dict(a=-0.0825, d=0.384, alpha=-math.pi / 2,  theta=0.0),
    dict(a=0.0,     d=0.0,   alpha=math.pi / 2,   theta=0.0),
    dict(a=0.088,   d=0.0,   alpha=math.pi / 2,   theta=0.0),
    dict(a=0.0,     d=0.107, alpha=0.0,           theta=0.0),
]


# ---------------- trace-time constant folding helpers for the DH chain ----------------
def _clean(v, tol=1e-12):
    """Snap trig of DH alphas to exact 0 / +1 / -1 so folding kicks in."""
    if abs(v) < tol:
        return 0.0
    if abs(v - 1.0) < tol:
        return 1.0
    if abs(v + 1.0) < tol:
        return -1.0
    return v


def _cf(v):
    """Python float -> folded term (None means exactly zero)."""
    return None if v == 0.0 else v


def _neg(v):
    if v is None:
        return None
    if isinstance(v, float):
        return _cf(-v)
    return -v


def _mul(u, v):
    """Multiply two terms; each is None (zero), a python float, or a jnp array."""
    if u is None or v is None:
        return None
    if isinstance(u, float) and isinstance(v, float):
        return _cf(u * v)
    if isinstance(v, float):
        u, v = v, u                       # now u is the float
    if isinstance(u, float):
        if u == 0.0:
            return None
        if u == 1.0:
            return v
        if u == -1.0:
            return -v
        return u * v
    return u * v


def _add(*terms):
    terms = [t for t in terms if t is not None]
    if not terms:
        return None
    acc = terms[0]
    for t in terms[1:]:
        acc = acc + t
    return acc


def _to_arr(v, shape):
    if v is None:
        return jnp.zeros(shape, jnp.float32)
    if isinstance(v, float):
        return jnp.full(shape, v, jnp.float32)
    return v


# ----------------------------------- Pallas kernel -----------------------------------
def _decoder_kid_kernel(n_layers, dh_params, dof, *refs):
    """refs = (x_t, w1, b1, ..., wn, bn, min_joints, max_joints, out).

    x_t: (in_dim, BLK) batch-in-lanes block; out: (7, BLK).
    """
    x_ref = refs[0]
    wb_refs = refs[1:1 + 2 * n_layers]
    minj_ref, maxj_ref, out_ref = refs[1 + 2 * n_layers:]

    # ---- MLP (self.net): h = W @ x + b, Softmax over feature axis (axis 0) ----
    h = x_ref[...]                                            # (in_dim, BLK)
    for li in range(n_layers):
        w = wb_refs[2 * li][...]                              # (out, in) torch layout
        b = wb_refs[2 * li + 1][...]                          # (out, 1)
        h = jnp.dot(w, h, preferred_element_type=jnp.float32) + b
        if li < n_layers - 1:                                 # default activation nn.Softmax
            m = jnp.max(h, axis=0, keepdims=True)
            e = jnp.exp(h - m)
            h = e * pl.reciprocal(jnp.sum(e, axis=0, keepdims=True), approx=True)

    # ---- decode_to_joints ----
    joint_pct = 0.5 + jnp.tanh(0.15 * h) * 0.4
    minj = minj_ref[...]                                      # (dof, 1)
    maxj = maxj_ref[...]
    joints = minj + (maxj - minj) * joint_pct                 # (dof, BLK)
    shp = (1, joints.shape[1])

    # ---- forward_kinematics_batch: Craig modified-DH chain, fully unrolled,
    #      constants folded at trace time (no multiplies by materialized 0/1). ----
    # TODO(synk): moppy's forward_kinematics_batch / EndEffectorPose sources were not
    # in the reference; standard Craig-convention chain + pytorch3d-style quaternion
    # extraction is used, output order [x, y, z, qx, qy, qz, qw].
    r00, r01, r02 = 1.0, None, None
    r10, r11, r12 = None, 1.0, None
    r20, r21, r22 = None, None, 1.0
    px, py, pz = None, None, None

    for i, prm in enumerate(dh_params):
        a = float(prm["a"])
        d = float(prm["d"])
        alpha = float(prm["alpha"])
        th_off = float(prm["theta"])
        ca = _clean(math.cos(alpha))
        sa = _clean(math.sin(alpha))

        if i < dof:
            theta = joints[i:i + 1, :]                        # (1, BLK) lane-dense
            if th_off != 0.0:
                theta = theta + th_off
            ct = jnp.cos(theta)
            st = jnp.sin(theta)
        else:                                                 # fixed flange link
            ct = _cf(_clean(math.cos(th_off)))
            st = _cf(_clean(math.sin(th_off)))

        csa, ssa = _cf(ca), _cf(sa)
        # Craig link transform (a02 == 0 always):
        a00, a01 = ct, _neg(st)
        a10, a11, a12 = _mul(st, csa), _mul(ct, csa), _neg(ssa)
        a20, a21, a22 = _mul(st, ssa), _mul(ct, ssa), csa
        tx, ty, tz = _cf(a), _cf(-sa * d), _cf(ca * d)

        n00 = _add(_mul(r00, a00), _mul(r01, a10), _mul(r02, a20))
        n01 = _add(_mul(r00, a01), _mul(r01, a11), _mul(r02, a21))
        n02 = _add(_mul(r01, a12), _mul(r02, a22))
        n10 = _add(_mul(r10, a00), _mul(r11, a10), _mul(r12, a20))
        n11 = _add(_mul(r10, a01), _mul(r11, a11), _mul(r12, a21))
        n12 = _add(_mul(r11, a12), _mul(r12, a22))
        n20 = _add(_mul(r20, a00), _mul(r21, a10), _mul(r22, a20))
        n21 = _add(_mul(r20, a01), _mul(r21, a11), _mul(r22, a21))
        n22 = _add(_mul(r21, a12), _mul(r22, a22))
        npx = _add(_mul(r00, tx), _mul(r01, ty), _mul(r02, tz), px)
        npy = _add(_mul(r10, tx), _mul(r11, ty), _mul(r12, tz), py)
        npz = _add(_mul(r20, tx), _mul(r21, ty), _mul(r22, tz), pz)

        r00, r01, r02 = n00, n01, n02
        r10, r11, r12 = n10, n11, n12
        r20, r21, r22 = n20, n21, n22
        px, py, pz = npx, npy, npz

    r00, r01, r02 = (_to_arr(v, shp) for v in (r00, r01, r02))
    r10, r11, r12 = (_to_arr(v, shp) for v in (r10, r11, r12))
    r20, r21, r22 = (_to_arr(v, shp) for v in (r20, r21, r22))
    px, py, pz = (_to_arr(v, shp) for v in (px, py, pz))

    # ---- rotation matrix -> quaternion (w,x,y,z), branchless candidate select ----
    def sqrt_pos(v):
        return jnp.sqrt(jnp.maximum(v, 0.0))

    qa_w = sqrt_pos(1.0 + r00 + r11 + r22)
    qa_x = sqrt_pos(1.0 + r00 - r11 - r22)
    qa_y = sqrt_pos(1.0 - r00 + r11 - r22)
    qa_z = sqrt_pos(1.0 - r00 - r11 + r22)

    # One EUP reciprocal per candidate instead of 16 divisions (renormalized below,
    # and the clamp max(., 0.1) only ever matters for the discarded candidates).
    inv_w = pl.reciprocal(2.0 * jnp.maximum(qa_w, 0.1), approx=True)
    inv_x = pl.reciprocal(2.0 * jnp.maximum(qa_x, 0.1), approx=True)
    inv_y = pl.reciprocal(2.0 * jnp.maximum(qa_y, 0.1), approx=True)
    inv_z = pl.reciprocal(2.0 * jnp.maximum(qa_z, 0.1), approx=True)

    cand_w = (qa_w * qa_w * inv_w, (r21 - r12) * inv_w,
              (r02 - r20) * inv_w, (r10 - r01) * inv_w)
    cand_x = ((r21 - r12) * inv_x, qa_x * qa_x * inv_x,
              (r10 + r01) * inv_x, (r02 + r20) * inv_x)
    cand_y = ((r02 - r20) * inv_y, (r10 + r01) * inv_y,
              qa_y * qa_y * inv_y, (r12 + r21) * inv_y)
    cand_z = ((r10 - r01) * inv_z, (r20 + r02) * inv_z,
              (r21 + r12) * inv_z, qa_z * qa_z * inv_z)

    def pick(cond, ca_, cb_):
        return tuple(jnp.where(cond, u, v) for u, v in zip(ca_, cb_))

    c_wx = pick(qa_w >= qa_x, cand_w, cand_x)
    m_wx = jnp.maximum(qa_w, qa_x)
    c_yz = pick(qa_y >= qa_z, cand_y, cand_z)
    m_yz = jnp.maximum(qa_y, qa_z)
    qw, qx, qy, qz = pick(m_wx >= m_yz, c_wx, c_yz)

    inv_norm = jax.lax.rsqrt(qw * qw + qx * qx + qy * qy + qz * qz)
    qw, qx, qy, qz = qw * inv_norm, qx * inv_norm, qy * inv_norm, qz * inv_norm

    # One lane-dense (7, BLK) store: EE pose rows [x, y, z, qx, qy, qz, qw].
    out_ref[...] = jnp.concatenate([px, py, pz, qx, qy, qz, qw], axis=0)


# ----------------------------------- wrapper (glue) -----------------------------------
def decoder_kid_promp_forward(latent_variable, time, params, *, block_lanes=None):
    """Equivalent of DecoderKIDProMP.forward(latent_variable, time)."""
    latent = jnp.asarray(latent_variable, jnp.float32)
    B = latent.shape[0]
    if isinstance(time, float):
        time = jnp.full((B, TIME_DIM), time, jnp.float32)
    time = jnp.asarray(time, jnp.float32).reshape(B, TIME_DIM)

    # torch.cat((latent_variable, time), dim=-1).float(); then batch -> lane axis.
    x = jnp.concatenate([latent, time], axis=-1)              # (B, in_dim)
    in_dim = x.shape[1]

    weights, biases = params["weights"], params["biases"]     # torch layout (out, in)
    n_layers = len(weights)

    # Batch-lane block: 128 fills the v5e MXU N dim / minimal padding for tiny B,
    # 256 fills the v6e/v7x 2x256 MXU; FK state stays <= 2 vregs per value.
    if block_lanes is None:
        block_lanes = 128 if B <= 128 else 256
    blk = block_lanes
    b_pad = ((B + blk - 1) // blk) * blk                      # remainder handled by padding
    x_t = jnp.pad(x.T, ((0, 0), (0, b_pad - B)))              # (in_dim, B_pad)

    flat_inputs = [x_t]
    in_specs = [pl.BlockSpec((in_dim, blk), lambda i: (0, i))]
    for w, b in zip(weights, biases):
        flat_inputs += [w, b]
        # Tiny tensors: constant index_map keeps them VMEM-resident across grid steps.
        in_specs += [pl.BlockSpec(w.shape, lambda i: (0, 0)),
                     pl.BlockSpec(b.shape, lambda i: (0, 0))]
    flat_inputs += [params["min_joints"], params["max_joints"]]
    in_specs += [pl.BlockSpec((DOF, 1), lambda i: (0, 0)),
                 pl.BlockSpec((DOF, 1), lambda i: (0, 0))]

    kernel = partial(_decoder_kid_kernel, n_layers, DH_PARAMS_CRAIG, DOF)

    out_t = pl.pallas_call(
        kernel,
        out_shape=jax.ShapeDtypeStruct((7, b_pad), jnp.float32),   # pos(3)+quat(4) per column
        grid=(b_pad // blk,),
        in_specs=in_specs,
        out_specs=pl.BlockSpec((7, blk), lambda i: (0, i)),
        compiler_params=pltpu.CompilerParams(
            dimension_semantics=("parallel",)),                    # megacore on v7x
    )(*flat_inputs)

    return out_t[:, :B].T                                          # (B, 7)


def init_params(key):
    """Deterministic Xavier-uniform weights (torch (out,in) layout), zero biases."""
    neurons = [LATENT_DIM + TIME_DIM] + HIDDEN + [DOF]
    weights, biases = [], []
    for i in range(len(neurons) - 1):
        key, sub = jax.random.split(key)
        fan_in, fan_out = neurons[i], neurons[i + 1]
        bound = math.sqrt(6.0 / (fan_in + fan_out))
        w = jax.random.uniform(sub, (fan_out, fan_in), jnp.float32, -bound, bound)
        weights.append(w)
        biases.append(jnp.zeros((fan_out, 1), jnp.float32))
    return {
        "weights": weights,
        "biases": biases,
        "min_joints": jnp.asarray(MIN_JOINTS, jnp.float32).reshape(DOF, 1),
        "max_joints": jnp.asarray(MAX_JOINTS, jnp.float32).reshape(DOF, 1),
    }


if __name__ == "__main__":
    key = jax.random.PRNGKey(0)
    pkey, zkey, tkey = jax.random.split(key, 3)

    params = init_params(pkey)
    B = 8
    latent = jax.random.normal(zkey, (B, LATENT_DIM), jnp.float32)
    time = jax.random.uniform(tkey, (B, TIME_DIM), jnp.float32)

    out = decoder_kid_promp_forward(latent, time, params)
    out = jax.block_until_ready(out)

    assert out.shape == (B, 7), out.shape
    assert bool(jnp.all(jnp.isfinite(out)))
    print("KERNEL_OK")
</pallas_src>

<mosaic_0001>
module attributes {stable_mosaic.version = 11 : i64} {
  func.func @_decoder_kid_kernel(%arg0: i32, %arg1: memref<4x128xf32, #tpu.memory_space<vmem>>, %arg2: memref<32x4xf32, #tpu.memory_space<vmem>>, %arg3: memref<32x1xf32, #tpu.memory_space<vmem>>, %arg4: memref<32x32xf32, #tpu.memory_space<vmem>>, %arg5: memref<32x1xf32, #tpu.memory_space<vmem>>, %arg6: memref<7x32xf32, #tpu.memory_space<vmem>>, %arg7: memref<7x1xf32, #tpu.memory_space<vmem>>, %arg8: memref<7x1xf32, #tpu.memory_space<vmem>>, %arg9: memref<7x1xf32, #tpu.memory_space<vmem>>, %arg10: memref<7x128xf32, #tpu.memory_space<vmem>>) attributes {dimension_semantics = [#tpu.dimension_semantics<parallel>], iteration_bounds = array<i64: 1>, scalar_prefetch = 0 : i64, scratch_operands = 0 : i64, tpu.core_type = #tpu.core_type<tc>, window_params = [{transform_indices = @transform_0, window_bounds = array<i64: 4, 128>}, {pipeline_mode = #tpu.pipeline_mode<synchronous>, transform_indices = @transform_1, window_bounds = array<i64: 32, 4>}, {pipeline_mode = #tpu.pipeline_mode<synchronous>, transform_indices = @transform_2, window_bounds = array<i64: 32, 1>}, {pipeline_mode = #tpu.pipeline_mode<synchronous>, transform_indices = @transform_3, window_bounds = array<i64: 32, 32>}, {pipeline_mode = #tpu.pipeline_mode<synchronous>, transform_indices = @transform_4, window_bounds = array<i64: 32, 1>}, {pipeline_mode = #tpu.pipeline_mode<synchronous>, transform_indices = @transform_5, window_bounds = array<i64: 7, 32>}, {pipeline_mode = #tpu.pipeline_mode<synchronous>, transform_indices = @transform_6, window_bounds = array<i64: 7, 1>}, {pipeline_mode = #tpu.pipeline_mode<synchronous>, transform_indices = @transform_7, window_bounds = array<i64: 7, 1>}, {pipeline_mode = #tpu.pipeline_mode<synchronous>, transform_indices = @transform_8, window_bounds = array<i64: 7, 1>}, {transform_indices = @transform_9, window_bounds = array<i64: 7, 128>}]} {
    %c0 = arith.constant 0 : index
    %c0_0 = arith.constant 0 : index
    %0 = vector.load %arg1[%c0, %c0_0] : memref<4x128xf32, #tpu.memory_space<vmem>>, vector<4x128xf32>
    %c0_1 = arith.constant 0 : index
    %c0_2 = arith.constant 0 : index
    %1 = vector.load %arg2[%c0_1, %c0_2] : memref<32x4xf32, #tpu.memory_space<vmem>>, vector<32x4xf32>
    %c0_3 = arith.constant 0 : index
    %c0_4 = arith.constant 0 : index
    %2 = vector.load %arg3[%c0_3, %c0_4] : memref<32x1xf32, #tpu.memory_space<vmem>>, vector<32x1xf32>
    %cst = arith.constant dense<0.000000e+00> : vector<32x128xf32>
    %3 = tpu.matmul %1, %0, %cst {dimension_numbers = #tpu.dot_dimension_numbers<[1], [0], [0], [1], [0, 0, 1, 1], [], []>} : vector<32x4xf32>, vector<4x128xf32>, vector<32x128xf32> -> vector<32x128xf32>
    %4 = vector.broadcast %2 : vector<32x1xf32> to vector<32x128xf32>
    %5 = arith.addf %3, %4 : vector<32x128xf32>
    %cst_5 = arith.constant dense<0xFF800000> : vector<128xf32>
    %6 = vector.multi_reduction <maximumf>, %5, %cst_5 [0] : vector<32x128xf32> to vector<128xf32>
    %7 = vector.shape_cast %6 : vector<128xf32> to vector<1x128xf32>
    %8 = vector.broadcast %7 : vector<1x128xf32> to vector<32x128xf32>
    %9 = arith.subf %5, %8 : vector<32x128xf32>
    %10 = math.exp %9 : vector<32x128xf32>
    %cst_6 = arith.constant dense<0.000000e+00> : vector<128xf32>
    %11 = vector.multi_reduction <add>, %10, %cst_6 [0] : vector<32x128xf32> to vector<128xf32>
    %12 = vector.shape_cast %11 : vector<128xf32> to vector<1x128xf32>
    %13 = tpu.reciprocal %12 {approx = true} : vector<1x128xf32> -> vector<1x128xf32>
    %14 = vector.broadcast %13 : vector<1x128xf32> to vector<32x128xf32>
    %15 = arith.mulf %10, %14 : vector<32x128xf32>
    %c0_7 = arith.constant 0 : index
    %c0_8 = arith.constant 0 : index
    %16 = vector.load %arg4[%c0_7, %c0_8] : memref<32x32xf32, #tpu.memory_space<vmem>>, vector<32x32xf32>
    %c0_9 = arith.constant 0 : index
    %c0_10 = arith.constant 0 : index
    %17 = vector.load %arg5[%c0_9, %c0_10] : memref<32x1xf32, #tpu.memory_space<vmem>>, vector<32x1xf32>
    %cst_11 = arith.constant dense<0.000000e+00> : vector<32x128xf32>
    %18 = tpu.matmul %16, %15, %cst_11 {dimension_numbers = #tpu.dot_dimension_numbers<[1], [0], [0], [1], [0, 0, 1, 1], [], []>} : vector<32x32xf32>, vector<32x128xf32>, vector<32x128xf32> -> vector<32x128xf32>
    %19 = vector.broadcast %17 : vector<32x1xf32> to vector<32x128xf32>
    %20 = arith.addf %18, %19 : vector<32x128xf32>
    %cst_12 = arith.constant dense<0xFF800000> : vector<128xf32>
    %21 = vector.multi_reduction <maximumf>, %20, %cst_12 [0] : vector<32x128xf32> to vector<128xf32>
    %22 = vector.shape_cast %21 : vector<128xf32> to vector<1x128xf32>
    %23 = vector.broadcast %22 : vector<1x128xf32> to vector<32x128xf32>
    %24 = arith.subf %20, %23 : vector<32x128xf32>
    %25 = math.exp %24 : vector<32x128xf32>
    %cst_13 = arith.constant dense<0.000000e+00> : vector<128xf32>
    %26 = vector.multi_reduction <add>, %25, %cst_13 [0] : vector<32x128xf32> to vector<128xf32>
    %27 = vector.shape_cast %26 : vector<128xf32> to vector<1x128xf32>
    %28 = tpu.reciprocal %27 {approx = true} : vector<1x128xf32> -> vector<1x128xf32>
    %29 = vector.broadcast %28 : vector<1x128xf32> to vector<32x128xf32>
    %30 = arith.mulf %25, %29 : vector<32x128xf32>
    %c0_14 = arith.constant 0 : index
    %c0_15 = arith.constant 0 : index
    %31 = vector.load %arg6[%c0_14, %c0_15] : memref<7x32xf32, #tpu.memory_space<vmem>>, vector<7x32xf32>
    %c0_16 = arith.constant 0 : index
    %c0_17 = arith.constant 0 : index
    %32 = vector.load %arg7[%c0_16, %c0_17] : memref<7x1xf32, #tpu.memory_space<vmem>>, vector<7x1xf32>
    %cst_18 = arith.constant dense<0.000000e+00> : vector<7x128xf32>
    %33 = tpu.matmul %31, %30, %cst_18 {dimension_numbers = #tpu.dot_dimension_numbers<[1], [0], [0], [1], [0, 0, 1, 1], [], []>} : vector<7x32xf32>, vector<32x128xf32>, vector<7x128xf32> -> vector<7x128xf32>
    %34 = vector.broadcast %32 : vector<7x1xf32> to vector<7x128xf32>
    %35 = arith.addf %33, %34 : vector<7x128xf32>
    %cst_19 = arith.constant 1.500000e-01 : f32
    %36 = vector.broadcast %cst_19 : f32 to vector<7x128xf32>
    %37 = arith.mulf %36, %35 : vector<7x128xf32>
    %38 = math.tanh %37 : vector<7x128xf32>
    %cst_20 = arith.constant 4.000000e-01 : f32
    %39 = vector.broadcast %cst_20 : f32 to vector<7x128xf32>
    %40 = arith.mulf %38, %39 : vector<7x128xf32>
    %cst_21 = arith.constant 5.000000e-01 : f32
    %41 = vector.broadcast %cst_21 : f32 to vector<7x128xf32>
    %42 = arith.addf %41, %40 : vector<7x128xf32>
    %c0_22 = arith.constant 0 : index
    %c0_23 = arith.constant 0 : index
    %43 = vector.load %arg8[%c0_22, %c0_23] : memref<7x1xf32, #tpu.memory_space<vmem>>, vector<7x1xf32>
    %c0_24 = arith.constant 0 : index
    %c0_25 = arith.constant 0 : index
    %44 = vector.load %arg9[%c0_24, %c0_25] : memref<7x1xf32, #tpu.memory_space<vmem>>, vector<7x1xf32>
    %45 = arith.subf %44, %43 : vector<7x1xf32>
    %46 = vector.broadcast %45 : vector<7x1xf32> to vector<7x128xf32>
    %47 = arith.mulf %46, %42 : vector<7x128xf32>
    %48 = vector.broadcast %43 : vector<7x1xf32> to vector<7x128xf32>
    %49 = arith.addf %48, %47 : vector<7x128xf32>
    %50 = vector.extract_strided_slice %49 {offsets = [0, 0], sizes = [1, 128], strides = [1, 1]} : vector<7x128xf32> to vector<1x128xf32>
    %51 = math.cos %50 : vector<1x128xf32>
    %52 = math.sin %50 : vector<1x128xf32>
    %cst_26 = arith.constant 0.000000e+00 : f32
    %53 = vector.broadcast %cst_26 : f32 to vector<1x128xf32>
    %54 = arith.subf %53, %52 : vector<1x128xf32>
    %55 = vector.extract_strided_slice %49 {offsets = [1, 0], sizes = [1, 128], strides = [1, 1]} : vector<7x128xf32> to vector<1x128xf32>
    %56 = math.cos %55 : vector<1x128xf32>
    %57 = math.sin %55 : vector<1x128xf32>
    %cst_27 = arith.constant 0.000000e+00 : f32
    %58 = vector.broadcast %cst_27 : f32 to vector<1x128xf32>
    %59 = arith.subf %58, %57 : vector<1x128xf32>
    %cst_28 = arith.constant 0.000000e+00 : f32
    %60 = vector.broadcast %cst_28 : f32 to vector<1x128xf32>
    %61 = arith.subf %60, %57 : vector<1x128xf32>
    %cst_29 = arith.constant 0.000000e+00 : f32
    %62 = vector.broadcast %cst_29 : f32 to vector<1x128xf32>
    %63 = arith.subf %62, %56 : vector<1x128xf32>
    %64 = arith.mulf %51, %56 : vector<1x128xf32>
    %65 = arith.mulf %51, %59 : vector<1x128xf32>
    %66 = arith.mulf %52, %56 : vector<1x128xf32>
    %67 = arith.mulf %52, %59 : vector<1x128xf32>
    %68 = vector.extract_strided_slice %49 {offsets = [2, 0], sizes = [1, 128], strides = [1, 1]} : vector<7x128xf32> to vector<1x128xf32>
    %69 = math.cos %68 : vector<1x128xf32>
    %70 = math.sin %68 : vector<1x128xf32>
    %cst_30 = arith.constant 0.000000e+00 : f32
    %71 = vector.broadcast %cst_30 : f32 to vector<1x128xf32>
    %72 = arith.subf %71, %70 : vector<1x128xf32>
    %73 = arith.mulf %64, %69 : vector<1x128xf32>
    %74 = arith.mulf %54, %70 : vector<1x128xf32>
    %75 = arith.addf %73, %74 : vector<1x128xf32>
    %76 = arith.mulf %64, %72 : vector<1x128xf32>
    %77 = arith.mulf %54, %69 : vector<1x128xf32>
    %78 = arith.addf %76, %77 : vector<1x128xf32>
    %cst_31 = arith.constant 0.000000e+00 : f32
    %79 = vector.broadcast %cst_31 : f32 to vector<1x128xf32>
    %80 = arith.subf %79, %65 : vector<1x128xf32>
    %81 = arith.mulf %66, %69 : vector<1x128xf32>
    %82 = arith.mulf %51, %70 : vector<1x128xf32>
    %83 = arith.addf %81, %82 : vector<1x128xf32>
    %84 = arith.mulf %66, %72 : vector<1x128xf32>
    %85 = arith.mulf %51, %69 : vector<1x128xf32>
    %86 = arith.addf %84, %85 : vector<1x128xf32>
    %cst_32 = arith.constant 0.000000e+00 : f32
    %87 = vector.broadcast %cst_32 : f32 to vector<1x128xf32>
    %88 = arith.subf %87, %67 : vector<1x128xf32>
    %89 = arith.mulf %61, %69 : vector<1x128xf32>
    %90 = arith.mulf %61, %72 : vector<1x128xf32>
    %cst_33 = arith.constant 0.000000e+00 : f32
    %91 = vector.broadcast %cst_33 : f32 to vector<1x128xf32>
    %92 = arith.subf %91, %63 : vector<1x128xf32>
    %cst_34 = arith.constant -3.160000e-01 : f32
    %93 = vector.broadcast %cst_34 : f32 to vector<1x128xf32>
    %94 = arith.mulf %93, %65 : vector<1x128xf32>
    %cst_35 = arith.constant -3.160000e-01 : f32
    %95 = vector.broadcast %cst_35 : f32 to vector<1x128xf32>
    %96 = arith.mulf %95, %67 : vector<1x128xf32>
    %cst_36 = arith.constant -3.160000e-01 : f32
    %97 = vector.broadcast %cst_36 : f32 to vector<1x128xf32>
    %98 = arith.mulf %97, %63 : vector<1x128xf32>
    %cst_37 = arith.constant 3.330000e-01 : f32
    %99 = vector.broadcast %cst_37 : f32 to vector<1x128xf32>
    %100 = arith.addf %98, %99 : vector<1x128xf32>
    %101 = vector.extract_strided_slice %49 {offsets = [3, 0], sizes = [1, 128], strides = [1, 1]} : vector<7x128xf32> to vector<1x128xf32>
    %102 = math.cos %101 : vector<1x128xf32>
    %103 = math.sin %101 : vector<1x128xf32>
    %cst_38 = arith.constant 0.000000e+00 : f32
    %104 = vector.broadcast %cst_38 : f32 to vector<1x128xf32>
    %105 = arith.subf %104, %103 : vector<1x128xf32>
    %106 = arith.mulf %75, %102 : vector<1x128xf32>
    %107 = arith.mulf %80, %103 : vector<1x128xf32>
    %108 = arith.addf %106, %107 : vector<1x128xf32>
    %109 = arith.mulf %75, %105 : vector<1x128xf32>
    %110 = arith.mulf %80, %102 : vector<1x128xf32>
    %111 = arith.addf %109, %110 : vector<1x128xf32>
    %cst_39 = arith.constant 0.000000e+00 : f32
    %112 = vector.broadcast %cst_39 : f32 to vector<1x128xf32>
    %113 = arith.subf %112, %78 : vector<1x128xf32>
    %114 = arith.mulf %83, %102 : vector<1x128xf32>
    %115 = arith.mulf %88, %103 : vector<1x128xf32>
    %116 = arith.addf %114, %115 : vector<1x128xf32>
    %117 = arith.mulf %83, %105 : vector<1x128xf32>
    %118 = arith.mulf %88, %102 : vector<1x128xf32>
    %119 = arith.addf %117, %118 : vector<1x128xf32>
    %cst_40 = arith.constant 0.000000e+00 : f32
    %120 = vector.broadcast %cst_40 : f32 to vector<1x128xf32>
    %121 = arith.subf %120, %86 : vector<1x128xf32>
    %122 = arith.mulf %89, %102 : vector<1x128xf32>
    %123 = arith.mulf %92, %103 : vector<1x128xf32>
    %124 = arith.addf %122, %123 : vector<1x128xf32>
    %125 = arith.mulf %89, %105 : vector<1x128xf32>
    %126 = arith.mulf %92, %102 : vector<1x128xf32>
    %127 = arith.addf %125, %126 : vector<1x128xf32>
    %cst_41 = arith.constant 0.000000e+00 : f32
    %128 = vector.broadcast %cst_41 : f32 to vector<1x128xf32>
    %129 = arith.subf %128, %90 : vector<1x128xf32>
    %cst_42 = arith.constant 8.250000e-02 : f32
    %130 = vector.broadcast %cst_42 : f32 to vector<1x128xf32>
    %131 = arith.mulf %130, %75 : vector<1x128xf32>
    %132 = arith.addf %131, %94 : vector<1x128xf32>
    %cst_43 = arith.constant 8.250000e-02 : f32
    %133 = vector.broadcast %cst_43 : f32 to vector<1x128xf32>
    %134 = arith.mulf %133, %83 : vector<1x128xf32>
    %135 = arith.addf %134, %96 : vector<1x128xf32>
    %cst_44 = arith.constant 8.250000e-02 : f32
    %136 = vector.broadcast %cst_44 : f32 to vector<1x128xf32>
    %137 = arith.mulf %136, %89 : vector<1x128xf32>
    %138 = arith.addf %137, %100 : vector<1x128xf32>
    %139 = vector.extract_strided_slice %49 {offsets = [4, 0], sizes = [1, 128], strides = [1, 1]} : vector<7x128xf32> to vector<1x128xf32>
    %140 = math.cos %139 : vector<1x128xf32>
    %141 = math.sin %139 : vector<1x128xf32>
    %cst_45 = arith.constant 0.000000e+00 : f32
    %142 = vector.broadcast %cst_45 : f32 to vector<1x128xf32>
    %143 = arith.subf %142, %141 : vector<1x128xf32>
    %cst_46 = arith.constant 0.000000e+00 : f32
    %144 = vector.broadcast %cst_46 : f32 to vector<1x128xf32>
    %145 = arith.subf %144, %141 : vector<1x128xf32>
    %cst_47 = arith.constant 0.000000e+00 : f32
    %146 = vector.broadcast %cst_47 : f32 to vector<1x128xf32>
    %147 = arith.subf %146, %140 : vector<1x128xf32>
    %148 = arith.mulf %108, %140 : vector<1x128xf32>
    %149 = arith.mulf %113, %145 : vector<1x128xf32>
    %150 = arith.addf %148, %149 : vector<1x128xf32>
    %151 = arith.mulf %108, %143 : vector<1x128xf32>
    %152 = arith.mulf %113, %147 : vector<1x128xf32>
    %153 = arith.addf %151, %152 : vector<1x128xf32>
    %154 = arith.mulf %116, %140 : vector<1x128xf32>
    %155 = arith.mulf %121, %145 : vector<1x128xf32>
    %156 = arith.addf %154, %155 : vector<1x128xf32>
    %157 = arith.mulf %116, %143 : vector<1x128xf32>
    %158 = arith.mulf %121, %147 : vector<1x128xf32>
    %159 = arith.addf %157, %158 : vector<1x128xf32>
    %160 = arith.mulf %124, %140 : vector<1x128xf32>
    %161 = arith.mulf %129, %145 : vector<1x128xf32>
    %162 = arith.addf %160, %161 : vector<1x128xf32>
    %163 = arith.mulf %124, %143 : vector<1x128xf32>
    %164 = arith.mulf %129, %147 : vector<1x128xf32>
    %165 = arith.addf %163, %164 : vector<1x128xf32>
    %cst_48 = arith.constant -8.250000e-02 : f32
    %166 = vector.broadcast %cst_48 : f32 to vector<1x128xf32>
    %167 = arith.mulf %166, %108 : vector<1x128xf32>
    %cst_49 = arith.constant 3.840000e-01 : f32
    %168 = vector.broadcast %cst_49 : f32 to vector<1x128xf32>
    %169 = arith.mulf %168, %111 : vector<1x128xf32>
    %170 = arith.addf %167, %169 : vector<1x128xf32>
    %171 = arith.addf %170, %132 : vector<1x128xf32>
    %cst_50 = arith.constant -8.250000e-02 : f32
    %172 = vector.broadcast %cst_50 : f32 to vector<1x128xf32>
    %173 = arith.mulf %172, %116 : vector<1x128xf32>
    %cst_51 = arith.constant 3.840000e-01 : f32
    %174 = vector.broadcast %cst_51 : f32 to vector<1x128xf32>
    %175 = arith.mulf %174, %119 : vector<1x128xf32>
    %176 = arith.addf %173, %175 : vector<1x128xf32>
    %177 = arith.addf %176, %135 : vector<1x128xf32>
    %cst_52 = arith.constant -8.250000e-02 : f32
    %178 = vector.broadcast %cst_52 : f32 to vector<1x128xf32>
    %179 = arith.mulf %178, %124 : vector<1x128xf32>
    %cst_53 = arith.constant 3.840000e-01 : f32
    %180 = vector.broadcast %cst_53 : f32 to vector<1x128xf32>
    %181 = arith.mulf %180, %127 : vector<1x128xf32>
    %182 = arith.addf %179, %181 : vector<1x128xf32>
    %183 = arith.addf %182, %138 : vector<1x128xf32>
    %184 = vector.extract_strided_slice %49 {offsets = [5, 0], sizes = [1, 128], strides = [1, 1]} : vector<7x128xf32> to vector<1x128xf32>
    %185 = math.cos %184 : vector<1x128xf32>
    %186 = math.sin %184 : vector<1x128xf32>
    %cst_54 = arith.constant 0.000000e+00 : f32
    %187 = vector.broadcast %cst_54 : f32 to vector<1x128xf32>
    %188 = arith.subf %187, %186 : vector<1x128xf32>
    %189 = arith.mulf %150, %185 : vector<1x128xf32>
    %190 = arith.mulf %111, %186 : vector<1x128xf32>
    %191 = arith.addf %189, %190 : vector<1x128xf32>
    %192 = arith.mulf %150, %188 : vector<1x128xf32>
    %193 = arith.mulf %111, %185 : vector<1x128xf32>
    %194 = arith.addf %192, %193 : vector<1x128xf32>
    %cst_55 = arith.constant 0.000000e+00 : f32
    %195 = vector.broadcast %cst_55 : f32 to vector<1x128xf32>
    %196 = arith.subf %195, %153 : vector<1x128xf32>
    %197 = arith.mulf %156, %185 : vector<1x128xf32>
    %198 = arith.mulf %119, %186 : vector<1x128xf32>
    %199 = arith.addf %197, %198 : vector<1x128xf32>
    %200 = arith.mulf %156, %188 : vector<1x128xf32>
    %201 = arith.mulf %119, %185 : vector<1x128xf32>
    %202 = arith.addf %200, %201 : vector<1x128xf32>
    %cst_56 = arith.constant 0.000000e+00 : f32
    %203 = vector.broadcast %cst_56 : f32 to vector<1x128xf32>
    %204 = arith.subf %203, %159 : vector<1x128xf32>
    %205 = arith.mulf %162, %185 : vector<1x128xf32>
    %206 = arith.mulf %127, %186 : vector<1x128xf32>
    %207 = arith.addf %205, %206 : vector<1x128xf32>
    %208 = arith.mulf %162, %188 : vector<1x128xf32>
    %209 = arith.mulf %127, %185 : vector<1x128xf32>
    %210 = arith.addf %208, %209 : vector<1x128xf32>
    %cst_57 = arith.constant 0.000000e+00 : f32
    %211 = vector.broadcast %cst_57 : f32 to vector<1x128xf32>
    %212 = arith.subf %211, %165 : vector<1x128xf32>
    %213 = vector.extract_strided_slice %49 {offsets = [6, 0], sizes = [1, 128], strides = [1, 1]} : vector<7x128xf32> to vector<1x128xf32>
    %214 = math.cos %213 : vector<1x128xf32>
    %215 = math.sin %213 : vector<1x128xf32>
    %cst_58 = arith.constant 0.000000e+00 : f32
    %216 = vector.broadcast %cst_58 : f32 to vector<1x128xf32>
    %217 = arith.subf %216, %215 : vector<1x128xf32>
    %218 = arith.mulf %191, %214 : vector<1x128xf32>
    %219 = arith.mulf %196, %215 : vector<1x128xf32>
    %220 = arith.addf %218, %219 : vector<1x128xf32>
    %221 = arith.mulf %191, %217 : vector<1x128xf32>
    %222 = arith.mulf %196, %214 : vector<1x128xf32>
    %223 = arith.addf %221, %222 : vector<1x128xf32>
    %cst_59 = arith.constant 0.000000e+00 : f32
    %224 = vector.broadcast %cst_59 : f32 to vector<1x128xf32>
    %225 = arith.subf %224, %194 : vector<1x128xf32>
    %226 = arith.mulf %199, %214 : vector<1x128xf32>
    %227 = arith.mulf %204, %215 : vector<1x128xf32>
    %228 = arith.addf %226, %227 : vector<1x128xf32>
    %229 = arith.mulf %199, %217 : vector<1x128xf32>
    %230 = arith.mulf %204, %214 : vector<1x128xf32>
    %231 = arith.addf %229, %230 : vector<1x128xf32>
    %cst_60 = arith.constant 0.000000e+00 : f32
    %232 = vector.broadcast %cst_60 : f32 to vector<1x128xf32>
    %233 = arith.subf %232, %202 : vector<1x128xf32>
    %234 = arith.mulf %207, %214 : vector<1x128xf32>
    %235 = arith.mulf %212, %215 : vector<1x128xf32>
    %236 = arith.addf %234, %235 : vector<1x128xf32>
    %237 = arith.mulf %207, %217 : vector<1x128xf32>
    %238 = arith.mulf %212, %214 : vector<1x128xf32>
    %239 = arith.addf %237, %238 : vector<1x128xf32>
    %cst_61 = arith.constant 0.000000e+00 : f32
    %240 = vector.broadcast %cst_61 : f32 to vector<1x128xf32>
    %241 = arith.subf %240, %210 : vector<1x128xf32>
    %cst_62 = arith.constant 0.0879999995 : f32
    %242 = vector.broadcast %cst_62 : f32 to vector<1x128xf32>
    %243 = arith.mulf %242, %191 : vector<1x128xf32>
    %244 = arith.addf %243, %171 : vector<1x128xf32>
    %cst_63 = arith.constant 0.0879999995 : f32
    %245 = vector.broadcast %cst_63 : f32 to vector<1x128xf32>
    %246 = arith.mulf %245, %199 : vector<1x128xf32>
    %247 = arith.addf %246, %177 : vector<1x128xf32>
    %cst_64 = arith.constant 0.0879999995 : f32
    %248 = vector.broadcast %cst_64 : f32 to vector<1x128xf32>
    %249 = arith.mulf %248, %207 : vector<1x128xf32>
    %250 = arith.addf %249, %183 : vector<1x128xf32>
    %cst_65 = arith.constant 1.070000e-01 : f32
    %251 = vector.broadcast %cst_65 : f32 to vector<1x128xf32>
    %252 = arith.mulf %251, %225 : vector<1x128xf32>
    %253 = arith.addf %252, %244 : vector<1x128xf32>
    %cst_66 = arith.constant 1.070000e-01 : f32
    %254 = vector.broadcast %cst_66 : f32 to vector<1x128xf32>
    %255 = arith.mulf %254, %233 : vector<1x128xf32>
    %256 = arith.addf %255, %247 : vector<1x128xf32>
    %cst_67 = arith.constant 1.070000e-01 : f32
    %257 = vector.broadcast %cst_67 : f32 to vector<1x128xf32>
    %258 = arith.mulf %257, %241 : vector<1x128xf32>
    %259 = arith.addf %258, %250 : vector<1x128xf32>
    %cst_68 = arith.constant 1.000000e+00 : f32
    %260 = vector.broadcast %cst_68 : f32 to vector<1x128xf32>
    %261 = arith.addf %260, %220 : vector<1x128xf32>
    %262 = arith.addf %261, %231 : vector<1x128xf32>
    %263 = arith.addf %262, %241 : vector<1x128xf32>
    %cst_69 = arith.constant 0.000000e+00 : f32
    %264 = vector.broadcast %cst_69 : f32 to vector<1x128xf32>
    %265 = arith.maximumf %263, %264 : vector<1x128xf32>
    %266 = math.sqrt %265 : vector<1x128xf32>
    %cst_70 = arith.constant 1.000000e+00 : f32
    %267 = vector.broadcast %cst_70 : f32 to vector<1x128xf32>
    %268 = arith.addf %267, %220 : vector<1x128xf32>
    %269 = arith.subf %268, %231 : vector<1x128xf32>
    %270 = arith.subf %269, %241 : vector<1x128xf32>
    %cst_71 = arith.constant 0.000000e+00 : f32
    %271 = vector.broadcast %cst_71 : f32 to vector<1x128xf32>
    %272 = arith.maximumf %270, %271 : vector<1x128xf32>
    %273 = math.sqrt %272 : vector<1x128xf32>
    %cst_72 = arith.constant 1.000000e+00 : f32
    %274 = vector.broadcast %cst_72 : f32 to vector<1x128xf32>
    %275 = arith.subf %274, %220 : vector<1x128xf32>
    %276 = arith.addf %275, %231 : vector<1x128xf32>
    %277 = arith.subf %276, %241 : vector<1x128xf32>
    %cst_73 = arith.constant 0.000000e+00 : f32
    %278 = vector.broadcast %cst_73 : f32 to vector<1x128xf32>
    %279 = arith.maximumf %277, %278 : vector<1x128xf32>
    %280 = math.sqrt %279 : vector<1x128xf32>
    %cst_74 = arith.constant 1.000000e+00 : f32
    %281 = vector.broadcast %cst_74 : f32 to vector<1x128xf32>
    %282 = arith.subf %281, %220 : vector<1x128xf32>
    %283 = arith.subf %282, %231 : vector<1x128xf32>
    %284 = arith.addf %283, %241 : vector<1x128xf32>
    %cst_75 = arith.constant 0.000000e+00 : f32
    %285 = vector.broadcast %cst_75 : f32 to vector<1x128xf32>
    %286 = arith.maximumf %284, %285 : vector<1x128xf32>
    %287 = math.sqrt %286 : vector<1x128xf32>
    %cst_76 = arith.constant 1.000000e-01 : f32
    %288 = vector.broadcast %cst_76 : f32 to vector<1x128xf32>
    %289 = arith.maximumf %266, %288 : vector<1x128xf32>
    %cst_77 = arith.constant 2.000000e+00 : f32
    %290 = vector.broadcast %cst_77 : f32 to vector<1x128xf32>
    %291 = arith.mulf %290, %289 : vector<1x128xf32>
    %292 = tpu.reciprocal %291 {approx = true} : vector<1x128xf32> -> vector<1x128xf32>
    %cst_78 = arith.constant 1.000000e-01 : f32
    %293 = vector.broadcast %cst_78 : f32 to vector<1x128xf32>
    %294 = arith.maximumf %273, %293 : vector<1x128xf32>
    %cst_79 = arith.constant 2.000000e+00 : f32
    %295 = vector.broadcast %cst_79 : f32 to vector<1x128xf32>
    %296 = arith.mulf %295, %294 : vector<1x128xf32>
    %297 = tpu.reciprocal %296 {approx = true} : vector<1x128xf32> -> vector<1x128xf32>
    %cst_80 = arith.constant 1.000000e-01 : f32
    %298 = vector.broadcast %cst_80 : f32 to vector<1x128xf32>
    %299 = arith.maximumf %280, %298 : vector<1x128xf32>
    %cst_81 = arith.constant 2.000000e+00 : f32
    %300 = vector.broadcast %cst_81 : f32 to vector<1x128xf32>
    %301 = arith.mulf %300, %299 : vector<1x128xf32>
    %302 = tpu.reciprocal %301 {approx = true} : vector<1x128xf32> -> vector<1x128xf32>
    %cst_82 = arith.constant 1.000000e-01 : f32
    %303 = vector.broadcast %cst_82 : f32 to vector<1x128xf32>
    %304 = arith.maximumf %287, %303 : vector<1x128xf32>
    %cst_83 = arith.constant 2.000000e+00 : f32
    %305 = vector.broadcast %cst_83 : f32 to vector<1x128xf32>
    %306 = arith.mulf %305, %304 : vector<1x128xf32>
    %307 = tpu.reciprocal %306 {approx = true} : vector<1x128xf32> -> vector<1x128xf32>
    %308 = arith.mulf %266, %266 : vector<1x128xf32>
    %309 = arith.mulf %308, %292 : vector<1x128xf32>
    %310 = arith.subf %239, %233 : vector<1x128xf32>
    %311 = arith.mulf %310, %292 : vector<1x128xf32>
    %312 = arith.subf %225, %236 : vector<1x128xf32>
    %313 = arith.mulf %312, %292 : vector<1x128xf32>
    %314 = arith.subf %228, %223 : vector<1x128xf32>
    %315 = arith.mulf %314, %292 : vector<1x128xf32>
    %316 = arith.subf %239, %233 : vector<1x128xf32>
    %317 = arith.mulf %316, %297 : vector<1x128xf32>
    %318 = arith.mulf %273, %273 : vector<1x128xf32>
    %319 = arith.mulf %318, %297 : vector<1x128xf32>
    %320 = arith.addf %228, %223 : vector<1x128xf32>
    %321 = arith.mulf %320, %297 : vector<1x128xf32>
    %322 = arith.addf %225, %236 : vector<1x128xf32>
    %323 = arith.mulf %322, %297 : vector<1x128xf32>
    %324 = arith.subf %225, %236 : vector<1x128xf32>
    %325 = arith.mulf %324, %302 : vector<1x128xf32>
    %326 = arith.addf %228, %223 : vector<1x128xf32>
    %327 = arith.mulf %326, %302 : vector<1x128xf32>
    %328 = arith.mulf %280, %280 : vector<1x128xf32>
    %329 = arith.mulf %328, %302 : vector<1x128xf32>
    %330 = arith.addf %233, %239 : vector<1x128xf32>
    %331 = arith.mulf %330, %302 : vector<1x128xf32>
    %332 = arith.subf %228, %223 : vector<1x128xf32>
    %333 = arith.mulf %332, %307 : vector<1x128xf32>
    %334 = arith.addf %236, %225 : vector<1x128xf32>
    %335 = arith.mulf %334, %307 : vector<1x128xf32>
    %336 = arith.addf %239, %233 : vector<1x128xf32>
    %337 = arith.mulf %336, %307 : vector<1x128xf32>
    %338 = arith.mulf %287, %287 : vector<1x128xf32>
    %339 = arith.mulf %338, %307 : vector<1x128xf32>
    %340 = arith.cmpf oge, %266, %273 : vector<1x128xf32>
    %341 = arith.select %340, %309, %317 : vector<1x128xi1>, vector<1x128xf32>
    %342 = arith.select %340, %311, %319 : vector<1x128xi1>, vector<1x128xf32>
    %343 = arith.select %340, %313, %321 : vector<1x128xi1>, vector<1x128xf32>
    %344 = arith.select %340, %315, %323 : vector<1x128xi1>, vector<1x128xf32>
    %345 = arith.maximumf %266, %273 : vector<1x128xf32>
    %346 = arith.cmpf oge, %280, %287 : vector<1x128xf32>
    %347 = arith.select %346, %325, %333 : vector<1x128xi1>, vector<1x128xf32>
    %348 = arith.select %346, %327, %335 : vector<1x128xi1>, vector<1x128xf32>
    %349 = arith.select %346, %329, %337 : vector<1x128xi1>, vector<1x128xf32>
    %350 = arith.select %346, %331, %339 : vector<1x128xi1>, vector<1x128xf32>
    %351 = arith.maximumf %280, %287 : vector<1x128xf32>
    %352 = arith.cmpf oge, %345, %351 : vector<1x128xf32>
    %353 = arith.select %352, %341, %347 : vector<1x128xi1>, vector<1x128xf32>
    %354 = arith.select %352, %342, %348 : vector<1x128xi1>, vector<1x128xf32>
    %355 = arith.select %352, %343, %349 : vector<1x128xi1>, vector<1x128xf32>
    %356 = arith.select %352, %344, %350 : vector<1x128xi1>, vector<1x128xf32>
    %357 = arith.mulf %353, %353 : vector<1x128xf32>
    %358 = arith.mulf %354, %354 : vector<1x128xf32>
    %359 = arith.addf %357, %358 : vector<1x128xf32>
    %360 = arith.mulf %355, %355 : vector<1x128xf32>
    %361 = arith.addf %359, %360 : vector<1x128xf32>
    %362 = arith.mulf %356, %356 : vector<1x128xf32>
    %363 = arith.addf %361, %362 : vector<1x128xf32>
    %364 = math.rsqrt %363 : vector<1x128xf32>
    %365 = arith.mulf %353, %364 : vector<1x128xf32>
    %366 = arith.mulf %354, %364 : vector<1x128xf32>
    %367 = arith.mulf %355, %364 : vector<1x128xf32>
    %368 = arith.mulf %356, %364 : vector<1x128xf32>
    %369 = tpu.concatenate %253, %256, %259, %366, %367, %368, %365 in 0 : vector<1x128xf32>, vector<1x128xf32>, vector<1x128xf32>, vector<1x128xf32>, vector<1x128xf32>, vector<1x128xf32>, vector<1x128xf32> -> vector<7x128xf32>
    %c0_84 = arith.constant 0 : index
    %c0_85 = arith.constant 0 : index
    %370 = vector.load %arg10[%c0_84, %c0_85] : memref<7x128xf32, #tpu.memory_space<vmem>>, vector<7x128xf32>
    tpu.vector_store %arg10[%c0_84, %c0_85], %369 {strides = array<i32>} : memref<7x128xf32, #tpu.memory_space<vmem>>, vector<7x128xf32>,
    return
  }
  func.func @transform_0(%arg0: i32) -> (i32, i32) {
    %c0_i32 = arith.constant 0 : i32
    %c0_i32_0 = arith.constant 0 : i32
    return %c0_i32, %arg0 : i32, i32
  }
  func.func @transform_1(%arg0: i32) -> (i32, i32) {
    %c0_i32 = arith.constant 0 : i32
    %c0_i32_0 = arith.constant 0 : i32
    %c0_i32_1 = arith.constant 0 : i32
    return %c0_i32, %c0_i32_0 : i32, i32
  }
  func.func @transform_2(%arg0: i32) -> (i32, i32) {
    %c0_i32 = arith.constant 0 : i32
    %c0_i32_0 = arith.constant 0 : i32
    %c0_i32_1 = arith.constant 0 : i32
    return %c0_i32, %c0_i32_0 : i32, i32
  }
  func.func @transform_3(%arg0: i32) -> (i32, i32) {
    %c0_i32 = arith.constant 0 : i32
    %c0_i32_0 = arith.constant 0 : i32
    %c0_i32_1 = arith.constant 0 : i32
    return %c0_i32, %c0_i32_0 : i32, i32
  }
  func.func @transform_4(%arg0: i32) -> (i32, i32) {
    %c0_i32 = arith.constant 0 : i32
    %c0_i32_0 = arith.constant 0 : i32
    %c0_i32_1 = arith.constant 0 : i32
    return %c0_i32, %c0_i32_0 : i32, i32
  }
  func.func @transform_5(%arg0: i32) -> (i32, i32) {
    %c0_i32 = arith.constant 0 : i32
    %c0_i32_0 = arith.constant 0 : i32
    %c0_i32_1 = arith.constant 0 : i32
    return %c0_i32, %c0_i32_0 : i32, i32
  }
  func.func @transform_6(%arg0: i32) -> (i32, i32) {
    %c0_i32 = arith.constant 0 : i32
    %c0_i32_0 = arith.constant 0 : i32
    %c0_i32_1 = arith.constant 0 : i32
    return %c0_i32, %c0_i32_0 : i32, i32
  }
  func.func @transform_7(%arg0: i32) -> (i32, i32) {
    %c0_i32 = arith.constant 0 : i32
    %c0_i32_0 = arith.constant 0 : i32
    %c0_i32_1 = arith.constant 0 : i32
    return %c0_i32, %c0_i32_0 : i32, i32
  }
  func.func @transform_8(%arg0: i32) -> (i32, i32) {
    %c0_i32 = arith.constant 0 : i32
    %c0_i32_0 = arith.constant 0 : i32
    %c0_i32_1 = arith.constant 0 : i32
    return %c0_i32, %c0_i32_0 : i32, i32
  }
  func.func @transform_9(%arg0: i32) -> (i32, i32) {
    %c0_i32 = arith.constant 0 : i32
    %c0_i32_0 = arith.constant 0 : i32
    return %c0_i32, %arg0 : i32, i32
  }
}

</mosaic_0001>

<llo_original>
// kernel: tpu_custom_call.1
$region0: #{tpu_custom_call.1}
  #allocation0 [shape = 'u32[]', space=smem, size = 0x4, offset = 0x4, fixed_abs, tag = 'smem constant byte address 0x4 - core index']
  #allocation1 [shape = 'u32[144,128]{1,0:T(1,128)}', space=vmem, size = 0x12000, scoped, tag = 'internal scratch']
  %s0 = inlined_call_operand.vmem [shape: f32[4,128], index: 0, kind: input, shape index: {}]
  %s1 = inlined_call_operand.vmem [shape: f32[32,4], index: 1, kind: input, shape index: {}]
  %s2 = inlined_call_operand.vmem [shape: f32[32,1], index: 2, kind: input, shape index: {}]
  %s3 = inlined_call_operand.vmem [shape: f32[32,32], index: 3, kind: input, shape index: {}]
  %s4 = inlined_call_operand.vmem [shape: f32[32,1], index: 4, kind: input, shape index: {}]
  %s5 = inlined_call_operand.vmem [shape: f32[7,32], index: 5, kind: input, shape index: {}]
  %s6 = inlined_call_operand.vmem [shape: f32[7,1], index: 6, kind: input, shape index: {}]
  %s7 = inlined_call_operand.vmem [shape: f32[7,1], index: 7, kind: input, shape index: {}]
  %s8 = inlined_call_operand.vmem [shape: f32[7,1], index: 8, kind: input, shape index: {}]
  %s9 = inlined_call_operand.hbm [shape: f32[7,128], index: 9, kind: output, shape index: {}]
  %s10 = sld [smem:[#allocation0]]
  $region46: #{tpu_custom_call.1} parent=0
    _
  %s12 = ssub.s32 1, %s10
  %s13 = scalar_select 0, %s12, %s10
  $region1: #{tpu_custom_call.1} parent=0
    #allocation2 [shape = 'u8[4096]{0}', space=vmem, size = 0x1000, scoped, tag = 'output window, operand 0, single buffered']
    #allocation3 [shape = 's32[1]{0}', space=sflag, size = 0x4, scoped, tag = 'scoped memory for tpu_custom_call.1']
    %14 = vsyncpa [#allocation3], 0
    // Predicated region
    $region2: #{tpu_custom_call.1} parent=1 // pred_check
      _
    $region3: #{tpu_custom_call.1} parent=1 // pred_check_branch
      %16 = sbr.rel (0) target = $region5
    $region4: #{tpu_custom_call.1} parent=1 // pred_region
      _
    $region5: #{tpu_custom_call.1} parent=1 // pred_fallthru
      _
    // Predicated region
    $region6: #{tpu_custom_call.1} parent=1 // pred_check
      _
    $region7: #{tpu_custom_call.1} parent=1 // pred_check_branch
      %18 = sbr.rel (0) target = $region9
    $region8: #{tpu_custom_call.1} parent=1 // pred_region
      _
    $region9: #{tpu_custom_call.1} parent=1 // pred_fallthru
      _
    // Predicated region
    $region10: #{tpu_custom_call.1} parent=1 // pred_check
      _
    $region11: #{tpu_custom_call.1} parent=1 // pred_check_branch
      %20 = sbr.rel (0) target = $region13
    $region12: #{tpu_custom_call.1} parent=1 // pred_region
      _
    $region13: #{tpu_custom_call.1} parent=1 // pred_fallthru
      _
    // Predicated region
    $region14: #{tpu_custom_call.1} parent=1 // pred_check
      _
    $region15: #{tpu_custom_call.1} parent=1 // pred_check_branch
      %22 = sbr.rel (0) target = $region17
    $region16: #{tpu_custom_call.1} parent=1 // pred_region
      _
    $region17: #{tpu_custom_call.1} parent=1 // pred_fallthru
      _
    // Predicated region
    $region18: #{tpu_custom_call.1} parent=1 // pred_check
      _
    $region19: #{tpu_custom_call.1} parent=1 // pred_check_branch
      %24 = sbr.rel (0) target = $region21
    $region20: #{tpu_custom_call.1} parent=1 // pred_region
      _
    $region21: #{tpu_custom_call.1} parent=1 // pred_fallthru
      _
    // Predicated region
    $region22: #{tpu_custom_call.1} parent=1 // pred_check
      _
    $region23: #{tpu_custom_call.1} parent=1 // pred_check_branch
      %26 = sbr.rel (0) target = $region25
    $region24: #{tpu_custom_call.1} parent=1 // pred_region
      _
    $region25: #{tpu_custom_call.1} parent=1 // pred_fallthru
      _
    // Predicated region
    $region26: #{tpu_custom_call.1} parent=1 // pred_check
      _
    $region27: #{tpu_custom_call.1} parent=1 // pred_check_branch
      %28 = sbr.rel (0) target = $region29
    $region28: #{tpu_custom_call.1} parent=1 // pred_region
      _
    $region29: #{tpu_custom_call.1} parent=1 // pred_fallthru
      _
    // Predicated region
    $region30: #{tpu_custom_call.1} parent=1 // pred_check
      _
    $region31: #{tpu_custom_call.1} parent=1 // pred_check_branch
      %30 = sbr.rel (0) target = $region33
    $region32: #{tpu_custom_call.1} parent=1 // pred_region
      _
    $region33: #{tpu_custom_call.1} parent=1 // pred_fallthru
      _
    // Predicated region
    $region34: #{tpu_custom_call.1} parent=1 // pred_check
      _
    $region35: #{tpu_custom_call.1} parent=1 // pred_check_branch
      %32 = sbr.rel (0) target = $region37
    $region36: #{tpu_custom_call.1} parent=1 // pred_region
      _
    $region37: #{tpu_custom_call.1} parent=1 // pred_fallthru
      _
    %v33 = vld [vmem:[%s0] sm:$0xf]
    %v34 = vld [vmem:[%s1] sm:$0xff]
    %v35 = vld [vmem:[%s1 + $0x8] sm:$0xff]
    %v36 = vld [vmem:[%s1 + $0x10] sm:$0xff]
    %v37 = vld [vmem:[%s1 + $0x18] sm:$0xff]
    %v38 = vld [vmem:[%s2] sm:$0xff]
    %v39 = vld [vmem:[%s2 + $0x8] sm:$0xff]
    %v40 = vld [vmem:[%s2 + $0x10] sm:$0xff]
    %v41 = vld [vmem:[%s2 + $0x18] sm:$0xff]
    %43 = vset.pattern.permute.xlu0 0
    %44 = vperm.xlu0 %43, %v38
    %v45 = vpop.permute.xlu0 %44
    %48 = vset.pattern.permute.xlu0 0
    %49 = vperm.xlu0 %48, %v39
    %v50 = vpop.permute.xlu0 %49
    %53 = vset.pattern.permute.xlu0 0
    %54 = vperm.xlu0 %53, %v40
    %v55 = vpop.permute.xlu0 %54
    %58 = vset.pattern.permute.xlu0 0
    %59 = vperm.xlu0 %58, %v41
    %v60 = vpop.permute.xlu0 %59
    %vm62 = vcmask 31744
    %v64 = vsel %vm62, %v34, 0
    %v67 = vsel %vm62, %v35, 0
    %v70 = vsel %vm62, %v36, 0
    %v73 = vsel %vm62, %v37, 0
    %vm75 = vcmask 1043456
    %v77 = vsel %vm75, %v33, 0
    %79 = vmatprep.subr.mxu0 0.0
    %80 = vmatpush1.msra.mxu0 %v77
    %81 = vmatprep.subr.mxu0 0.0
    %82 = vmatpush1.msra.mxu0 0.0
    %83 = vmatprep.subr.mxu0 0.0
    %84 = vmatpush1.msra.mxu0 0.0
    %85 = vmatprep.subr.mxu0 0.0
    %86 = vmatpush1.msra.mxu0 0.0
    %87 = vmatprep.subr.mxu0 0.0
    %88 = vmatpush1.msra.mxu0 0.0
    %89 = vmatprep.subr.mxu0 0.0
    %90 = vmatpush1.msra.mxu0 0.0
    %91 = vmatprep.subr.mxu0 0.0
    %92 = vmatpush1.msra.mxu0 0.0
    %93 = vmatprep.subr.mxu0 0.0
    %94 = vmatpush1.msra.mxu0 0.0
    %95 = vmatprep.subr.mxu0 0.0
    %96 = vmatpush1.msra.mxu0 0.0
    %97 = vmatprep.subr.mxu0 0.0
    %98 = vmatpush1.msra.mxu0 0.0
    %99 = vmatprep.subr.mxu0 0.0
    %100 = vmatpush1.msra.mxu0 0.0
    %101 = vmatprep.subr.mxu0 0.0
    %102 = vmatpush1.msra.mxu0 0.0
    %103 = vmatprep.subr.mxu0 0.0
    %104 = vmatpush1.msra.mxu0 0.0
    %105 = vmatprep.subr.mxu0 0.0
    %106 = vmatpush1.msra.mxu0 0.0
    %107 = vmatprep.subr.mxu0 0.0
    %108 = vmatpush1.msra.mxu0 0.0
    %109 = vmatprep.subr.mxu0 0.0
    %110 = vmatpush1.msra.mxu0 0.0
    %111 = vmatprep.subr.mxu0 0.0
    %112 = vmatpush1.msra.mxu0 0.0
    %113 = vmatprep.subr.mxu0 0.0
    %114 = vmatpush1.msra.mxu0 0.0
    %115 = vmatprep.subr.mxu0 0.0
    %116 = vmatpush1.msra.mxu0 0.0
    %117 = vmatprep.subr.mxu0 0.0
    %118 = vmatpush1.msra.mxu0 0.0
    %119 = vmatprep.subr.mxu0 0.0
    %120 = vmatpush1.msra.mxu0 0.0
    %121 = vmatprep.subr.mxu0 0.0
    %122 = vmatpush1.msra.mxu0 0.0
    %123 = vmatprep.subr.mxu0 0.0
    %124 = vmatpush1.msra.mxu0 0.0
    %125 = vmatprep.subr.mxu0 0.0
    %126 = vmatpush1.msra.mxu0 0.0
    %127 = vmatprep.subr.mxu0 0.0
    %128 = vmatpush1.msra.mxu0 0.0
    %129 = vmatprep.subr.mxu0 0.0
    %130 = vmatpush1.msra.mxu0 0.0
    %131 = vmatprep.subr.mxu0 0.0
    %132 = vmatpush1.msra.mxu0 0.0
    %133 = vmatprep.subr.mxu0 0.0
    %134 = vmatpush1.msra.mxu0 0.0
    %135 = vmatprep.subr.mxu0 0.0
    %136 = vmatpush1.msra.mxu0 0.0
    %137 = vmatprep.subr.mxu0 0.0
    %138 = vmatpush1.msra.mxu0 0.0
    %139 = vmatprep.subr.mxu0 0.0
    %140 = vmatpush1.msra.mxu0 0.0
    %141 = vmatprep.subr.mxu0 0.0
    %142 = vmatpush1.msra.mxu0 0.0
    %143 = vmatprep.mubr.f32.mxu0 0.0
    %144 = vmatmul.mubr.f32.gmra.mrb[0].mxu0 %v64
    %v145 = vpop.f32.mrb[0].mxu0
    %v146 = vadd.f32 %v45, %v145
    %v147 = vpop.f32.mrb[0].mxu0
    %148 = vmatprep.mubr.f32.mxu0 0.0
    %149 = vmatmul.mubr.f32.gmra.mrb[0].mxu0 %v67
    %v150 = vpop.f32.mrb[0].mxu0
    %v151 = vadd.f32 %v50, %v150
    %v152 = vpop.f32.mrb[0].mxu0
    %153 = vmatprep.mubr.f32.mxu0 0.0
    %154 = vmatmul.mubr.f32.gmra.mrb[0].mxu0 %v70
    %v155 = vpop.f32.mrb[0].mxu0
    %v156 = vadd.f32 %v55, %v155
    %v157 = vpop.f32.mrb[0].mxu0
    %158 = vmatprep.mubr.f32.mxu0 0.0
    %159 = vmatmul.mubr.f32.gmra.mrb[0].mxu0 %v73
    %v160 = vpop.f32.mrb[0].mxu0
    %v161 = vadd.f32 %v60, %v160
    %v162 = vpop.f32.mrb[0].mxu0
    %163 = vdwg.mxu0
    %v164 = vmax.f32 %v146, %v151
    %v165 = vmax.f32 %v156, %v161
    %v166 = vmax.f32 %v164, %v165
    %v167 = vrot.slane %v166, 4
    %v168 = vmax.f32 %v166, %v167
    %v169 = vrot.slane %v168, 2
    %v170 = vmax.f32 %v168, %v169
    %v171 = vrot.slane %v170, 1
    %v172 = vmax.f32 %v170, %v171
    %v173 = vsub.f32 %v146, %v172
    %v174 = vsub.f32 %v151, %v172
    %v175 = vsub.f32 %v156, %v172
    %v176 = vsub.f32 %v161, %v172
    %v177 = vmul.f32 %v173, 1.442695
    %v178 = vpow.pop %v177
    %v179 = vmul.f32 %v174, 1.442695
    %v180 = vpow.pop %v179
    %v181 = vmul.f32 %v175, 1.442695
    %v182 = vpow.pop %v181
    %v183 = vmul.f32 %v176, 1.442695
    %v184 = vpow.pop %v183
    %v185 = vadd.f32 %v178, %v180
    %v186 = vadd.f32 %v185, %v182
    %v187 = vadd.f32 %v186, %v184
    %v188 = vrot.slane %v187, 4
    %v189 = vadd.f32 %v187, %v188
    %v190 = vrot.slane %v189, 2
    %v191 = vadd.f32 %v189, %v190
    %v192 = vrot.slane %v191, 1
    %v193 = vadd.f32 %v191, %v192
    %v194 = vrcp.pop %v193
    %v195 = vmul.f32 %v178, %v194
    %v196 = vmul.f32 %v180, %v194
    %v197 = vmul.f32 %v182, %v194
    %v198 = vmul.f32 %v184, %v194
    %v199 = vld [vmem:[%s3] sm:$0xff]
    %v200 = vld [vmem:[%s3 + $0x8] sm:$0xff]
    %v201 = vld [vmem:[%s3 + $0x10] sm:$0xff]
    %v202 = vld [vmem:[%s3 + $0x18] sm:$0xff]
    %v203 = vld [vmem:[%s4] sm:$0xff]
    %v204 = vld [vmem:[%s4 + $0x8] sm:$0xff]
    %v205 = vld [vmem:[%s4 + $0x10] sm:$0xff]
    %v206 = vld [vmem:[%s4 + $0x18] sm:$0xff]
    %208 = vset.pattern.permute.xlu0 0
    %209 = vperm.xlu0 %208, %v203
    %v210 = vpop.permute.xlu0 %209
    %213 = vset.pattern.permute.xlu0 0
    %214 = vperm.xlu0 %213, %v204
    %v215 = vpop.permute.xlu0 %214
    %218 = vset.pattern.permute.xlu0 0
    %219 = vperm.xlu0 %218, %v205
    %v220 = vpop.permute.xlu0 %219
    %223 = vset.pattern.permute.xlu0 0
    %224 = vperm.xlu0 %223, %v206
    %v225 = vpop.permute.xlu0 %224
    %vm227 = vcmask 261120
    %v229 = vsel %vm227, %v199, 0
    %v232 = vsel %vm227, %v200, 0
    %v235 = vsel %vm227, %v201, 0
    %v238 = vsel %vm227, %v202, 0
    %240 = vmatprep.subr.mxu0 0.0
    %241 = vmatpush1.msra.mxu0 %v195
    %242 = vmatprep.subr.mxu0 0.0
    %243 = vmatpush1.msra.mxu0 %v196
    %244 = vmatprep.subr.mxu0 0.0
    %245 = vmatpush1.msra.mxu0 %v197
    %246 = vmatprep.subr.mxu0 0.0
    %247 = vmatpush1.msra.mxu0 %v198
    %248 = vmatprep.subr.mxu0 0.0
    %249 = vmatpush1.msra.mxu0 0.0
    %250 = vmatprep.subr.mxu0 0.0
    %251 = vmatpush1.msra.mxu0 0.0
    %252 = vmatprep.subr.mxu0 0.0
    %253 = vmatpush1.msra.mxu0 0.0
    %254 = vmatprep.subr.mxu0 0.0
    %255 = vmatpush1.msra.mxu0 0.0
    %256 = vmatprep.subr.mxu0 0.0
    %257 = vmatpush1.msra.mxu0 0.0
    %258 = vmatprep.subr.mxu0 0.0
    %259 = vmatpush1.msra.mxu0 0.0
    %260 = vmatprep.subr.mxu0 0.0
    %261 = vmatpush1.msra.mxu0 0.0
    %262 = vmatprep.subr.mxu0 0.0
    %263 = vmatpush1.msra.mxu0 0.0
    %264 = vmatprep.subr.mxu0 0.0
    %265 = vmatpush1.msra.mxu0 0.0
    %266 = vmatprep.subr.mxu0 0.0
    %267 = vmatpush1.msra.mxu0 0.0
    %268 = vmatprep.subr.mxu0 0.0
    %269 = vmatpush1.msra.mxu0 0.0
    %270 = vmatprep.subr.mxu0 0.0
    %271 = vmatpush1.msra.mxu0 0.0
    %272 = vmatprep.subr.mxu0 0.0
    %273 = vmatpush1.msra.mxu0 0.0
    %274 = vmatprep.subr.mxu0 0.0
    %275 = vmatpush1.msra.mxu0 0.0
    %276 = vmatprep.subr.mxu0 0.0
    %277 = vmatpush1.msra.mxu0 0.0
    %278 = vmatprep.subr.mxu0 0.0
    %279 = vmatpush1.msra.mxu0 0.0
    %280 = vmatprep.subr.mxu0 0.0
    %281 = vmatpush1.msra.mxu0 0.0
    %282 = vmatprep.subr.mxu0 0.0
    %283 = vmatpush1.msra.mxu0 0.0
    %284 = vmatprep.subr.mxu0 0.0
    %285 = vmatpush1.msra.mxu0 0.0
    %286 = vmatprep.subr.mxu0 0.0
    %287 = vmatpush1.msra.mxu0 0.0
    %288 = vmatprep.subr.mxu0 0.0
    %289 = vmatpush1.msra.mxu0 0.0
    %290 = vmatprep.subr.mxu0 0.0
    %291 = vmatpush1.msra.mxu0 0.0
    %292 = vmatprep.subr.mxu0 0.0
    %293 = vmatpush1.msra.mxu0 0.0
    %294 = vmatprep.subr.mxu0 0.0
    %295 = vmatpush1.msra.mxu0 0.0
    %296 = vmatprep.subr.mxu0 0.0
    %297 = vmatpush1.msra.mxu0 0.0
    %298 = vmatprep.subr.mxu0 0.0
    %299 = vmatpush1.msra.mxu0 0.0
    %300 = vmatprep.subr.mxu0 0.0
    %301 = vmatpush1.msra.mxu0 0.0
    %302 = vmatprep.subr.mxu0 0.0
    %303 = vmatpush1.msra.mxu0 0.0
    %304 = vmatprep.mubr.f32.mxu0 0.0
    %305 = vmatmul.mubr.f32.gmra.mrb[0].mxu0 %v229
    %v306 = vpop.f32.mrb[0].mxu0
    %v307 = vadd.f32 %v210, %v306
    %v308 = vpop.f32.mrb[0].mxu0
    %309 = vmatprep.mubr.f32.mxu0 0.0
    %310 = vmatmul.mubr.f32.gmra.mrb[0].mxu0 %v232
    %v311 = vpop.f32.mrb[0].mxu0
    %v312 = vadd.f32 %v215, %v311
    %v313 = vpop.f32.mrb[0].mxu0
    %314 = vmatprep.mubr.f32.mxu0 0.0
    %315 = vmatmul.mubr.f32.gmra.mrb[0].mxu0 %v235
    %v316 = vpop.f32.mrb[0].mxu0
    %v317 = vadd.f32 %v220, %v316
    %v318 = vpop.f32.mrb[0].mxu0
    %319 = vmatprep.mubr.f32.mxu0 0.0
    %320 = vmatmul.mubr.f32.gmra.mrb[0].mxu0 %v238
    %v321 = vpop.f32.mrb[0].mxu0
    %v322 = vadd.f32 %v225, %v321
    %v323 = vpop.f32.mrb[0].mxu0
    %324 = vdwg.mxu0
    %v325 = vmax.f32 %v307, %v312
    %v326 = vmax.f32 %v317, %v322
    %v327 = vmax.f32 %v325, %v326
    %v328 = vrot.slane %v327, 4
    %v329 = vmax.f32 %v327, %v328
    %v330 = vrot.slane %v329, 2
    %v331 = vmax.f32 %v329, %v330
    %v332 = vrot.slane %v331, 1
    %v333 = vmax.f32 %v331, %v332
    %v334 = vsub.f32 %v307, %v333
    %v335 = vsub.f32 %v312, %v333
    %v336 = vsub.f32 %v317, %v333
    %v337 = vsub.f32 %v322, %v333
    %v338 = vmul.f32 %v334, 1.442695
    %v339 = vpow.pop %v338
    %v340 = vmul.f32 %v335, 1.442695
    %v341 = vpow.pop %v340
    %v342 = vmul.f32 %v336, 1.442695
    %v343 = vpow.pop %v342
    %v344 = vmul.f32 %v337, 1.442695
    %v345 = vpow.pop %v344
    %v346 = vadd.f32 %v339, %v341
    %v347 = vadd.f32 %v346, %v343
    %v348 = vadd.f32 %v347, %v345
    %v349 = vrot.slane %v348, 4
    %v350 = vadd.f32 %v348, %v349
    %v351 = vrot.slane %v350, 2
    %v352 = vadd.f32 %v350, %v351
    %v353 = vrot.slane %v352, 1
    %v354 = vadd.f32 %v352, %v353
    %v355 = vrcp.pop %v354
    %v356 = vmul.f32 %v339, %v355
    %v357 = vmul.f32 %v341, %v355
    %v358 = vmul.f32 %v343, %v355
    %v359 = vmul.f32 %v345, %v355
    %v360 = vld [vmem:[%s5] sm:$0x7f]
    %v361 = vld [vmem:[%s6] sm:$0x7f]
    %363 = vset.pattern.permute.xlu0 0
    %364 = vperm.xlu0 %363, %v361
    %v365 = vpop.permute.xlu0 %364
    %v368 = vsel %vm227, %v360, 0
    %370 = vmatprep.subr.mxu0 0.0
    %371 = vmatpush1.msra.mxu0 %v356
    %372 = vmatprep.subr.mxu0 0.0
    %373 = vmatpush1.msra.mxu0 %v357
    %374 = vmatprep.subr.mxu0 0.0
    %375 = vmatpush1.msra.mxu0 %v358
    %376 = vmatprep.subr.mxu0 0.0
    %377 = vmatpush1.msra.mxu0 %v359
    %378 = vmatprep.subr.mxu0 0.0
    %379 = vmatpush1.msra.mxu0 0.0
    %380 = vmatprep.subr.mxu0 0.0
    %381 = vmatpush1.msra.mxu0 0.0
    %382 = vmatprep.subr.mxu0 0.0
    %383 = vmatpush1.msra.mxu0 0.0
    %384 = vmatprep.subr.mxu0 0.0
    %385 = vmatpush1.msra.mxu0 0.0
    %386 = vmatprep.subr.mxu0 0.0
    %387 = vmatpush1.msra.mxu0 0.0
    %388 = vmatprep.subr.mxu0 0.0
    %389 = vmatpush1.msra.mxu0 0.0
    %390 = vmatprep.subr.mxu0 0.0
    %391 = vmatpush1.msra.mxu0 0.0
    %392 = vmatprep.subr.mxu0 0.0
    %393 = vmatpush1.msra.mxu0 0.0
    %394 = vmatprep.subr.mxu0 0.0
    %395 = vmatpush1.msra.mxu0 0.0
    %396 = vmatprep.subr.mxu0 0.0
    %397 = vmatpush1.msra.mxu0 0.0
    %398 = vmatprep.subr.mxu0 0.0
    %399 = vmatpush1.msra.mxu0 0.0
    %400 = vmatprep.subr.mxu0 0.0
    %401 = vmatpush1.msra.mxu0 0.0
    %402 = vmatprep.subr.mxu0 0.0
    %403 = vmatpush1.msra.mxu0 0.0
    %404 = vmatprep.subr.mxu0 0.0
    %405 = vmatpush1.msra.mxu0 0.0
    %406 = vmatprep.subr.mxu0 0.0
    %407 = vmatpush1.msra.mxu0 0.0
    %408 = vmatprep.subr.mxu0 0.0
    %409 = vmatpush1.msra.mxu0 0.0
    %410 = vmatprep.subr.mxu0 0.0
    %411 = vmatpush1.msra.mxu0 0.0
    %412 = vmatprep.subr.mxu0 0.0
    %413 = vmatpush1.msra.mxu0 0.0
    %414 = vmatprep.subr.mxu0 0.0
    %415 = vmatpush1.msra.mxu0 0.0
    %416 = vmatprep.subr.mxu0 0.0
    %417 = vmatpush1.msra.mxu0 0.0
    %418 = vmatprep.subr.mxu0 0.0
    %419 = vmatpush1.msra.mxu0 0.0
    %420 = vmatprep.subr.mxu0 0.0
    %421 = vmatpush1.msra.mxu0 0.0
    %422 = vmatprep.subr.mxu0 0.0
    %423 = vmatpush1.msra.mxu0 0.0
    %424 = vmatprep.subr.mxu0 0.0
    %425 = vmatpush1.msra.mxu0 0.0
    %426 = vmatprep.subr.mxu0 0.0
    %427 = vmatpush1.msra.mxu0 0.0
    %428 = vmatprep.subr.mxu0 0.0
    %429 = vmatpush1.msra.mxu0 0.0
    %430 = vmatprep.subr.mxu0 0.0
    %431 = vmatpush1.msra.mxu0 0.0
    %432 = vmatprep.subr.mxu0 0.0
    %433 = vmatpush1.msra.mxu0 0.0
    %434 = vmatprep.mubr.f32.mxu0 0.0
    %435 = vmatmul.mubr.f32.gmra.mrb[0].mxu0 %v368
    %v436 = vpop.f32.mrb[0].mxu0
    %v437 = vadd.f32 %v365, %v436
    %v438 = vpop.f32.mrb[0].mxu0
    %439 = vdwg.mxu0
    %v440 = vmul.f32 %v437, 0.15
    %v441 = vtanh.pop %v440
    %v442 = vmul.f32 %v441, 0.4
    %v443 = vadd.f32 %v442, 0.5
    %v444 = vld [vmem:[%s7] sm:$0x7f]
    %v445 = vld [vmem:[%s8] sm:$0x7f]
    %v446 = vsub.f32 %v445, %v444
    %448 = vset.pattern.permute.xlu0 0
    %449 = vperm.xlu0 %448, %v446
    %v450 = vpop.permute.xlu0 %449
    %v452 = vmul.f32 %v450, %v443
    %454 = vset.pattern.permute.xlu0 0
    %455 = vperm.xlu0 %454, %v444
    %v456 = vpop.permute.xlu0 %455
    %v458 = vadd.f32 %v456, %v452
    %v459 = vand.u32 2147483647, %v458
    %vm460 = vcmp.le.f32.partialorder %v459, 0.7853982
    %vm461 = vcmp.lt.s32.totalorder %v458, 0
    %v462 = vand.u32 %v458, 2139095040
    %v463 = vshrl.u32 %v462, 23
    %v464 = vsub.s32 %v463, 127
    %v465 = vand.u32 2147483647, %v458
    %v466 = vand.u32 %v465, 8388607
    %v467 = vor.u32 %v466, 8388608
    %v468 = vsub.s32 0, %v467
    %v469 = vadd.s32 %v464, 1
    %vm470 = vcmp.gt.s32.totalorder %v469, 0
    %v471 = vsel %vm470, %v469, 0
    %v472 = vshrl.u32 %v471, 5
    %v473 = vand.u32 %v471, 31
    %v474 = vsub.s32 32, %v473
    %v475 = vshrl.u32 683565275, %v474
    %v476 = vshll.u32 683565275, %v473
    %v477 = vshrl.u32 2475754826, %v474
    %v478 = vor.u32 %v476, %v477
    %v479 = vshll.u32 2475754826, %v473
    %v480 = vshrl.u32 2131351028, %v474
    %v481 = vor.u32 %v479, %v480
    %v482 = vshll.u32 2131351028, %v473
    %v483 = vshrl.u32 2102212464, %v474
    %v484 = vor.u32 %v482, %v483
    %v485 = vshll.u32 2102212464, %v473
    %v486 = vshrl.u32 920167782, %v474
    %v487 = vor.u32 %v485, %v486
    %v488 = vshll.u32 920167782, %v473
    %v489 = vshrl.u32 1326507024, %v474
    %v490 = vor.u32 %v488, %v489
    %vm491 = vcmp.lt.s32.totalorder %v472, 1
    %vm492 = vcmp.lt.s32.totalorder %v472, 2
    %vm493 = vcmp.lt.s32.totalorder %v472, 3
    %vm494 = vcmp.lt.s32.totalorder %v472, 4
    %v495 = vsel %vm491, %v475, %v478
    %v496 = vsel %vm494, %v484, 2102212464
    %v497 = vsel %vm493, %v481, %v496
    %v498 = vsel %vm492, %v495, %v497
    %v499 = vsel %vm491, %v478, %v481
    %v500 = vsel %vm494, %v487, 920167782
    %v501 = vsel %vm493, %v484, %v500
    %v502 = vsel %vm492, %v499, %v501
    %v503 = vsel %vm491, %v481, %v484
    %v504 = vsel %vm494, %v490, 1326507024
    %v505 = vsel %vm493, %v487, %v504
    %v506 = vsel %vm492, %v503, %v505
    %v507 = vshll.u32 %v467, 8
    %v508 = vmul.u32.u64.compose %v507, %v506
    %v509 = vextract.low.u32 %v508
    %v510 = vextract.high.u32 %v508
    %v511 = vmul.u32.u64.compose %v507, %v502
    %v512 = vextract.low.u32 %v511
    %v513 = vextract.high.u32 %v511
    %v514 = vmul.u32 %v507, %v498
    %v515 = vadd.s32 %v510, %v512
    %vm516 = vc.u32 %v510, %v512
    %v517 = vadd.s32 %v513, 1
    %v518 = vsel %vm516, %v517, %v513
    %v519 = vadd.s32 %v514, %v518
    %v520 = vadd.s32 %v519, 536870912
    %v521 = vshrl.u32 %v520, 30
    %v522 = vshll.u32 %v521, 30
    %v523 = vsub.s32 %v519, %v522
    %vm524 = vcmp.lt.s32.totalorder %v523, 0
    %v525 = vsub.s32 0, %v523
    %v526 = vsel %vm524, %v525, %v523
    %v527 = vclz %v526
    %v528 = vsub.s32 %v527, 2
    %vm529 = vcmp.gt.s32.totalorder 0, %v528
    %v530 = vsel %vm529, 0, %v528
    %v531 = vsub.s32 32, %v530
    %v532 = vshll.u32 %v523, %v530
    %v533 = vshrl.u32 %v515, %v531
    %v534 = vor.u32 %v532, %v533
    %v535 = vsub.s32 4294967266, %v530
    %v536 = vadd.s32 %v535, 127
    %v537 = vshll.u32 %v536, 23
    %v538 = vor.u32 4788187, %v537
    %v539 = vand.u32 2147483647, %v538
    %v541 = vcvt.s32.f32 %v534
    %v542 = vmul.f32 %v541, %v539
    %v543 = vxor.u32 %v542, 2147483648
    %v544 = vsel %vm461, %v543, %v542
    %v545 = vsub.s32 4, %v521
    %v546 = vsel %vm461, %v545, %v521
    %v547 = vsel %vm460, %v458, %v544
    %v548 = vsel %vm460, 0, %v546
    %v549 = vcosq.f32.pop %v547
    %v550 = vsinq.f32.pop %v547
    %vm551 = vweird.f32 %v458
    %v552 = vand.u32 %v548, 3
    %vm553 = vcmp.lt.s32.totalorder %v552, 2
    %vm554 = vcmp.eq.s32.totalorder %v552, 0
    %v555 = vxor.u32 %v550, 2147483648
    %v556 = vsel %vm554, %v549, %v555
    %vm557 = vcmp.eq.s32.totalorder %v552, 2
    %v558 = vxor.u32 %v549, 2147483648
    %v559 = vsel %vm557, %v558, %v550
    %v560 = vsel %vm553, %v556, %v559
    %v561 = vsel %vm551, nan, %v560
    %v562 = vand.u32 2147483647, %v458
    %vm563 = vcmp.le.f32.partialorder %v562, 0.7853982
    %vm564 = vcmp.lt.s32.totalorder %v458, 0
    %v565 = vand.u32 %v458, 2139095040
    %v566 = vshrl.u32 %v565, 23
    %v567 = vsub.s32 %v566, 127
    %v568 = vand.u32 2147483647, %v458
    %v569 = vand.u32 %v568, 8388607
    %v570 = vor.u32 %v569, 8388608
    %v571 = vsub.s32 0, %v570
    %v572 = vadd.s32 %v567, 1
    %vm573 = vcmp.gt.s32.totalorder %v572, 0
    %v574 = vsel %vm573, %v572, 0
    %v575 = vshrl.u32 %v574, 5
    %v576 = vand.u32 %v574, 31
    %v577 = vsub.s32 32, %v576
    %v578 = vshrl.u32 683565275, %v577
    %v579 = vshll.u32 683565275, %v576
    %v580 = vshrl.u32 2475754826, %v577
    %v581 = vor.u32 %v579, %v580
    %v582 = vshll.u32 2475754826, %v576
    %v583 = vshrl.u32 2131351028, %v577
    %v584 = vor.u32 %v582, %v583
    %v585 = vshll.u32 2131351028, %v576
    %v586 = vshrl.u32 2102212464, %v577
    %v587 = vor.u32 %v585, %v586
    %v588 = vshll.u32 2102212464, %v576
    %v589 = vshrl.u32 920167782, %v577
    %v590 = vor.u32 %v588, %v589
    %v591 = vshll.u32 920167782, %v576
    %v592 = vshrl.u32 1326507024, %v577
    %v593 = vor.u32 %v591, %v592
    %vm594 = vcmp.lt.s32.totalorder %v575, 1
    %vm595 = vcmp.lt.s32.totalorder %v575, 2
    %vm596 = vcmp.lt.s32.totalorder %v575, 3
    %vm597 = vcmp.lt.s32.totalorder %v575, 4
    %v598 = vsel %vm594, %v578, %v581
    %v599 = vsel %vm597, %v587, 2102212464
    %v600 = vsel %vm596, %v584, %v599
    %v601 = vsel %vm595, %v598, %v600
    %v602 = vsel %vm594, %v581, %v584
    %v603 = vsel %vm597, %v590, 920167782
    %v604 = vsel %vm596, %v587, %v603
    %v605 = vsel %vm595, %v602, %v604
    %v606 = vsel %vm594, %v584, %v587
    %v607 = vsel %vm597, %v593, 1326507024
    %v608 = vsel %vm596, %v590, %v607
    %v609 = vsel %vm595, %v606, %v608
    %v610 = vshll.u32 %v570, 8
    %v611 = vmul.u32.u64.compose %v610, %v609
    %v612 = vextract.low.u32 %v611
    %v613 = vextract.high.u32 %v611
    %v614 = vmul.u32.u64.compose %v610, %v605
    %v615 = vextract.low.u32 %v614
    %v616 = vextract.high.u32 %v614
    %v617 = vmul.u32 %v610, %v601
    %v618 = vadd.s32 %v613, %v615
    %vm619 = vc.u32 %v613, %v615
    %v620 = vadd.s32 %v616, 1
    %v621 = vsel %vm619, %v620, %v616
    %v622 = vadd.s32 %v617, %v621
    %v623 = vadd.s32 %v622, 536870912
    %v624 = vshrl.u32 %v623, 30
    %v625 = vshll.u32 %v624, 30
    %v626 = vsub.s32 %v622, %v625
    %vm627 = vcmp.lt.s32.totalorder %v626, 0
    %v628 = vsub.s32 0, %v626
    %v629 = vsel %vm627, %v628, %v626
    %v630 = vclz %v629
    %v631 = vsub.s32 %v630, 2
    %vm632 = vcmp.gt.s32.totalorder 0, %v631
    %v633 = vsel %vm632, 0, %v631
    %v634 = vsub.s32 32, %v633
    %v635 = vshll.u32 %v626, %v633
    %v636 = vshrl.u32 %v618, %v634
    %v637 = vor.u32 %v635, %v636
    %v638 = vsub.s32 4294967266, %v633
    %v639 = vadd.s32 %v638, 127
    %v640 = vshll.u32 %v639, 23
    %v641 = vor.u32 4788187, %v640
    %v642 = vand.u32 2147483647, %v641
    %v644 = vcvt.s32.f32 %v637
    %v645 = vmul.f32 %v644, %v642
    %v646 = vxor.u32 %v645, 2147483648
    %v647 = vsel %vm564, %v646, %v645
    %v648 = vsub.s32 4, %v624
    %v649 = vsel %vm564, %v648, %v624
    %v650 = vsel %vm563, %v458, %v647
    %v651 = vsel %vm563, 0, %v649
    %v652 = vcosq.f32.pop %v650
    %v653 = vsinq.f32.pop %v650
    %vm654 = vweird.f32 %v458
    %v655 = vadd.s32 %v651, 3
    %v656 = vand.u32 %v655, 3
    %vm657 = vcmp.lt.s32.totalorder %v656, 2
    %vm658 = vcmp.eq.s32.totalorder %v656, 0
    %v659 = vxor.u32 %v653, 2147483648
    %v660 = vsel %vm658, %v652, %v659
    %vm661 = vcmp.eq.s32.totalorder %v656, 2
    %v662 = vxor.u32 %v652, 2147483648
    %v663 = vsel %vm661, %v662, %v653
    %v664 = vsel %vm657, %v660, %v663
    %v665 = vsel %vm654, nan, %v664
    %v666 = vsub.f32 0.0, %v665
    %v667 = vsub.f32 0.0, %v561
    %v669 = vrot.slane %v561, 1
    %v671 = vmul.f32 %v561, %v669
    %v673 = vrot.slane %v666, 1
    %v675 = vmul.f32 %v561, %v673
    %v676 = vmul.f32 %v665, %v669
    %v677 = vmul.f32 %v665, %v673
    %v678 = vrot.slane %v561, 2
    %v680 = vmul.f32 %v671, %v678
    %v682 = vrot.slane %v665, 2
    %v684 = vmul.f32 %v666, %v682
    %v685 = vadd.f32 %v680, %v684
    %v686 = vrot.slane %v666, 2
    %v688 = vmul.f32 %v671, %v686
    %v689 = vmul.f32 %v666, %v678
    %v690 = vadd.f32 %v688, %v689
    %v691 = vsub.f32 0.0, %v675
    %v692 = vmul.f32 %v676, %v678
    %v693 = vmul.f32 %v561, %v682
    %v694 = vadd.f32 %v692, %v693
    %v695 = vmul.f32 %v676, %v686
    %v696 = vmul.f32 %v561, %v678
    %v697 = vadd.f32 %v695, %v696
    %v698 = vsub.f32 0.0, %v677
    %v699 = vmul.f32 %v666, %v669
    %v700 = vmul.f32 %v666, %v673
    %v701 = vsub.f32 0.0, %v667
    %v702 = vmul.f32 %v675, -0.316
    %v703 = vmul.f32 %v677, -0.316
    %v704 = vmul.f32 %v667, -0.316
    %v705 = vadd.f32 %v704, 0.333
    %v706 = vrot.slane %v561, 3
    %v708 = vmul.f32 %v685, %v706
    %v709 = vrot.slane %v665, 3
    %v711 = vmul.f32 %v691, %v709
    %v712 = vadd.f32 %v708, %v711
    %v713 = vrot.slane %v666, 3
    %v715 = vmul.f32 %v685, %v713
    %v716 = vmul.f32 %v691, %v706
    %v717 = vadd.f32 %v715, %v716
    %v718 = vsub.f32 0.0, %v690
    %v719 = vmul.f32 %v694, %v706
    %v720 = vmul.f32 %v698, %v709
    %v721 = vadd.f32 %v719, %v720
    %v722 = vmul.f32 %v694, %v713
    %v723 = vmul.f32 %v698, %v706
    %v724 = vadd.f32 %v722, %v723
    %v725 = vsub.f32 0.0, %v697
    %v726 = vmul.f32 %v699, %v678
    %v727 = vmul.f32 %v701, %v682
    %v728 = vadd.f32 %v726, %v727
    %v729 = vmul.f32 %v699, %v686
    %v730 = vmul.f32 %v701, %v678
    %v731 = vadd.f32 %v729, %v730
    %v732 = vsub.f32 0.0, %v700
    %v733 = vmul.f32 %v685, 0.0825
    %v734 = vadd.f32 %v733, %v702
    %v735 = vmul.f32 %v694, 0.0825
    %v736 = vadd.f32 %v735, %v703
    %v737 = vmul.f32 %v699, 0.0825
    %v738 = vadd.f32 %v737, %v705
    %v739 = vrot.slane %v561, 4
    %v741 = vmul.f32 %v712, %v739
    %v742 = vrot.slane %v666, 4
    %v744 = vmul.f32 %v718, %v742
    %v745 = vadd.f32 %v741, %v744
    %v746 = vmul.f32 %v712, %v742
    %v748 = vrot.slane %v667, 4
    %v750 = vmul.f32 %v718, %v748
    %v751 = vadd.f32 %v746, %v750
    %v752 = vmul.f32 %v721, %v739
    %v753 = vmul.f32 %v725, %v742
    %v754 = vadd.f32 %v752, %v753
    %v755 = vmul.f32 %v721, %v742
    %v756 = vmul.f32 %v725, %v748
    %v757 = vadd.f32 %v755, %v756
    %v758 = vmul.f32 %v728, %v706
    %v759 = vmul.f32 %v732, %v713
    %v760 = vadd.f32 %v758, %v759
    %v761 = vmul.f32 %v728, %v713
    %v762 = vrot.slane %v667, 3
    %v764 = vmul.f32 %v732, %v762
    %v765 = vadd.f32 %v761, %v764
    %v766 = vmul.f32 %v712, -0.0825
    %v767 = vmul.f32 %v717, 0.384
    %v768 = vadd.f32 %v766, %v767
    %v769 = vadd.f32 %v768, %v734
    %v770 = vmul.f32 %v721, -0.0825
    %v771 = vmul.f32 %v724, 0.384
    %v772 = vadd.f32 %v770, %v771
    %v773 = vadd.f32 %v772, %v736
    %v774 = vmul.f32 %v728, -0.0825
    %v775 = vmul.f32 %v731, 0.384
    %v776 = vadd.f32 %v774, %v775
    %v777 = vadd.f32 %v776, %v738
    %v778 = vrot.slane %v561, 5
    %v780 = vmul.f32 %v745, %v778
    %v781 = vrot.slane %v665, 5
    %v783 = vmul.f32 %v717, %v781
    %v784 = vadd.f32 %v780, %v783
    %v785 = vrot.slane %v666, 5
    %v787 = vmul.f32 %v745, %v785
    %v788 = vmul.f32 %v717, %v778
    %v789 = vadd.f32 %v787, %v788
    %v790 = vsub.f32 0.0, %v751
    %v791 = vmul.f32 %v754, %v778
    %v792 = vmul.f32 %v724, %v781
    %v793 = vadd.f32 %v791, %v792
    %v794 = vmul.f32 %v754, %v785
    %v795 = vmul.f32 %v724, %v778
    %v796 = vadd.f32 %v794, %v795
    %v797 = vsub.f32 0.0, %v757
    %v798 = vmul.f32 %v760, %v739
    %v799 = vrot.slane %v665, 4
    %v801 = vmul.f32 %v731, %v799
    %v802 = vadd.f32 %v798, %v801
    %v803 = vmul.f32 %v760, %v742
    %v804 = vmul.f32 %v731, %v739
    %v805 = vadd.f32 %v803, %v804
    %v806 = vsub.f32 0.0, %v765
    %v807 = vrot.slane %v561, 6
    %v809 = vmul.f32 %v784, %v807
    %v810 = vrot.slane %v665, 6
    %v812 = vmul.f32 %v790, %v810
    %v813 = vadd.f32 %v809, %v812
    %v814 = vrot.slane %v666, 6
    %v816 = vmul.f32 %v784, %v814
    %v817 = vmul.f32 %v790, %v807
    %v818 = vadd.f32 %v816, %v817
    %v819 = vsub.f32 0.0, %v789
    %v820 = vmul.f32 %v793, %v807
    %v821 = vmul.f32 %v797, %v810
    %v822 = vadd.f32 %v820, %v821
    %v823 = vmul.f32 %v793, %v814
    %v824 = vmul.f32 %v797, %v807
    %v825 = vadd.f32 %v823, %v824
    %v826 = vsub.f32 0.0, %v796
    %v827 = vmul.f32 %v802, %v778
    %v828 = vmul.f32 %v806, %v781
    %v829 = vadd.f32 %v827, %v828
    %v830 = vmul.f32 %v802, %v785
    %v831 = vmul.f32 %v806, %v778
    %v832 = vadd.f32 %v830, %v831
    %v833 = vsub.f32 0.0, %v805
    %v834 = vmul.f32 %v784, 0.088
    %v835 = vadd.f32 %v834, %v769
    %v836 = vmul.f32 %v793, 0.088
    %v837 = vadd.f32 %v836, %v773
    %v838 = vmul.f32 %v802, 0.088
    %v839 = vadd.f32 %v838, %v777
    %v840 = vmul.f32 %v819, 0.107
    %v841 = vadd.f32 %v840, %v835
    %v842 = vmul.f32 %v826, 0.107
    %v843 = vadd.f32 %v842, %v837
    %v844 = vmul.f32 %v833, 0.107
    %v845 = vadd.f32 %v844, %v839
    %v846 = vadd.f32 %v813, 1.0
    %v847 = vadd.f32 %v846, %v825
    %v849 = vrot.slane %v833, 1
    %v851 = vadd.f32 %v847, %v849
    %v852 = vmax.f32 %v851, 0.0
    %v853 = vrsqrt.pop %v852
    %v854 = vmul.f32 %v852, %v853
    %vm855 = vcmp.eq.f32.partialorder %v852, inf
    %v856 = vsel %vm855, %v852, %v854
    %vm857 = vcmp.eq.f32.partialorder %v852, 0.0
    %v858 = vand.u32 %v852, 2147483648
    %v859 = vsel %vm857, %v858, %v856
    %v860 = vsub.f32 %v846, %v825
    %v861 = vsub.f32 %v860, %v849
    %v862 = vmax.f32 %v861, 0.0
    %v863 = vrsqrt.pop %v862
    %v864 = vmul.f32 %v862, %v863
    %vm865 = vcmp.eq.f32.partialorder %v862, inf
    %v866 = vsel %vm865, %v862, %v864
    %vm867 = vcmp.eq.f32.partialorder %v862, 0.0
    %v868 = vand.u32 %v862, 2147483648
    %v869 = vsel %vm867, %v868, %v866
    %v870 = vsub.f32 1.0, %v813
    %v871 = vadd.f32 %v870, %v825
    %v872 = vsub.f32 %v871, %v849
    %v873 = vmax.f32 %v872, 0.0
    %v874 = vrsqrt.pop %v873
    %v875 = vmul.f32 %v873, %v874
    %vm876 = vcmp.eq.f32.partialorder %v873, inf
    %v877 = vsel %vm876, %v873, %v875
    %vm878 = vcmp.eq.f32.partialorder %v873, 0.0
    %v879 = vand.u32 %v873, 2147483648
    %v880 = vsel %vm878, %v879, %v877
    %v881 = vsub.f32 %v870, %v825
    %v882 = vadd.f32 %v881, %v849
    %v883 = vmax.f32 %v882, 0.0
    %v884 = vrsqrt.pop %v883
    %v885 = vmul.f32 %v883, %v884
    %vm886 = vcmp.eq.f32.partialorder %v883, inf
    %v887 = vsel %vm886, %v883, %v885
    %vm888 = vcmp.eq.f32.partialorder %v883, 0.0
    %v889 = vand.u32 %v883, 2147483648
    %v890 = vsel %vm888, %v889, %v887
    %v891 = vmax.f32 %v859, 0.1
    %v892 = vmul.f32 %v891, 2.0
    %v893 = vrcp.pop %v892
    %v894 = vmax.f32 %v869, 0.1
    %v895 = vmul.f32 %v894, 2.0
    %v896 = vrcp.pop %v895
    %v897 = vmax.f32 %v880, 0.1
    %v898 = vmul.f32 %v897, 2.0
    %v899 = vrcp.pop %v898
    %v900 = vmax.f32 %v890, 0.1
    %v901 = vmul.f32 %v900, 2.0
    %v902 = vrcp.pop %v901
    %v903 = vmul.f32 %v859, %v859
    %v904 = vmul.f32 %v903, %v893
    %v906 = vrot.slane %v826, 7
    %v908 = vsub.f32 %v832, %v906
    %v910 = vrot.slane %v893, 7
    %v912 = vmul.f32 %v908, %v910
    %v914 = vrot.slane %v829, 1
    %v916 = vsub.f32 %v819, %v914
    %v917 = vmul.f32 %v916, %v893
    %v918 = vsub.f32 %v822, %v818
    %v919 = vmul.f32 %v918, %v893
    %v921 = vrot.slane %v896, 7
    %v923 = vmul.f32 %v908, %v921
    %v924 = vmul.f32 %v869, %v869
    %v925 = vmul.f32 %v924, %v896
    %v926 = vadd.f32 %v822, %v818
    %v927 = vmul.f32 %v926, %v896
    %v928 = vadd.f32 %v819, %v914
    %v929 = vmul.f32 %v928, %v896
    %v930 = vmul.f32 %v916, %v899
    %v931 = vmul.f32 %v926, %v899
    %v932 = vmul.f32 %v880, %v880
    %v933 = vmul.f32 %v932, %v899
    %v935 = vrot.slane %v832, 1
    %v937 = vadd.f32 %v826, %v935
    %v938 = vmul.f32 %v937, %v899
    %v939 = vmul.f32 %v918, %v902
    %v940 = vmul.f32 %v928, %v902
    %v941 = vmul.f32 %v937, %v902
    %v942 = vmul.f32 %v890, %v890
    %v943 = vmul.f32 %v942, %v902
    %vm944 = vcmp.ge.f32.partialorder %v859, %v869
    %v946 = vrot.slane %v923, 1
    %v948 = vsel %vm944, %v904, %v946
    %v950 = vrot.slane %v912, 1
    %v952 = vsel %vm944, %v950, %v925
    %v953 = vsel %vm944, %v917, %v927
    %v954 = vsel %vm944, %v919, %v929
    %v955 = vmax.f32 %v859, %v869
    %vm956 = vcmp.ge.f32.partialorder %v880, %v890
    %v957 = vsel %vm956, %v930, %v939
    %v958 = vsel %vm956, %v931, %v940
    %v959 = vsel %vm956, %v933, %v941
    %v960 = vsel %vm956, %v938, %v943
    %v961 = vmax.f32 %v880, %v890
    %vm962 = vcmp.ge.f32.partialorder %v955, %v961
    %v963 = vsel %vm962, %v948, %v957
    %v964 = vsel %vm962, %v952, %v958
    %v965 = vsel %vm962, %v953, %v959
    %v966 = vsel %vm962, %v954, %v960
    %v967 = vmul.f32 %v963, %v963
    %v968 = vmul.f32 %v964, %v964
    %v969 = vadd.f32 %v967, %v968
    %v970 = vmul.f32 %v965, %v965
    %v971 = vadd.f32 %v969, %v970
    %v972 = vmul.f32 %v966, %v966
    %v973 = vadd.f32 %v971, %v972
    %v974 = vrsqrt.pop %v973
    %v975 = vmul.f32 %v963, %v974
    %v976 = vmul.f32 %v964, %v974
    %v977 = vmul.f32 %v965, %v974
    %v978 = vmul.f32 %v966, %v974
    %v980 = vrot.slane %v843, 7
    %v983 = vrot.slane %v845, 7
    %v986 = vrot.slane %v976, 5
    %v989 = vrot.slane %v977, 4
    %v992 = vrot.slane %v978, 3
    %v995 = vrot.slane %v975, 2
    %vm997 = vcmask 1040384
    %v998 = vsel %vm997, %v841, %v980
    %vm999 = vcmask 1041408
    %v1000 = vsel %vm999, %v998, %v983
    %vm1001 = vcmask 1042432
    %v1002 = vsel %vm1001, %v1000, %v986
    %v1003 = vsel %vm75, %v1002, %v989
    %vm1004 = vcmask 1044480
    %v1005 = vsel %vm1004, %v1003, %v992
    %vm1006 = vcmask 1045504
    %v1007 = vsel %vm1006, %v1005, %v995
    %1008 = vst [vmem:[#allocation2] sm:$0x7f] %v1007
    // Predicated region
    $region38: #{tpu_custom_call.1} parent=1 // pred_check
      _
    $region39: #{tpu_custom_call.1} parent=1 // pred_check_branch
      %1010 = sbr.rel (0) target = $region41
    $region40: #{tpu_custom_call.1} parent=1 // pred_region
      %s1012 = ssub.s32 128, 128
      %1013 = vsyncadd [#allocation3], %s1012
      %s1015 = sshll.u32 [#allocation2], 4
      %s1016 = int_to_ptr.vmem [resolvable:$true] %s1015
      %1018 = dma.vmem_to_hbm [thread:$0]  %s1016, 128, %s9, [#allocation3]
    $region41: #{tpu_custom_call.1} parent=1 // pred_fallthru
      _
    // Predicated region
    $region42: #{tpu_custom_call.1} parent=1 // pred_check
      _
    $region43: #{tpu_custom_call.1} parent=1 // pred_check_branch
      %1020 = sbr.rel (0) target = $region45
    $region44: #{tpu_custom_call.1} parent=1 // pred_region
      %1021 = dma.done [#allocation3], 128
    $region45: #{tpu_custom_call.1} parent=1 // pred_fallthru
      _
    %1022 = vsyncpa [#allocation3], 1

</llo_original>
